<compile_context>
chip_gen: v7x
topology: tpu7x:2x2x1
jax: 0.10.0
libtpu: 0.0.40
codegen_flags: <defaults>
</compile_context>

<pallas_src>
import functools

import jax
import jax.numpy as jnp
from jax.experimental import pallas as pl
from jax.experimental.pallas import tpu as pltpu


def _largest_divisor_at_most(n, cap):
    cap = max(1, min(n, cap))
    for d in range(cap, 0, -1):
        if n % d == 0:
            return d
    return 1


def _dw_pw_kernel(x_ref, wt_ref, y_ref, psum_ref, psq_ref, xp_scr, *,
                  h, w, c_in, c_out, k, dil, pad, th, w_out, hp, wp):
    """One (image n, output-row block hb) tile: pad -> K*K folded MXU matmuls -> y + stats."""
    f32 = jnp.float32
    hb = pl.program_id(1)

    # ---- Stage 0: build the zero-padded image in VMEM scratch once per image.
    # Only the halo strips are zeroed (interior is overwritten immediately) -> no
    # write amplification on v5e's single vector-store slot.  Scratch stays in the
    # input dtype (bf16-ready); cast happens at the matmul operand.
    @pl.when(hb == 0)
    def _build_padded():
        if pad > 0:
            row_strip = jnp.zeros((pad, wp, c_in), xp_scr.dtype)
            xp_scr[0:pad, :, :] = row_strip
            xp_scr[pad + h:hp, :, :] = row_strip
            col_strip = jnp.zeros((hp, pad, c_in), xp_scr.dtype)
            xp_scr[:, 0:pad, :] = col_strip
            xp_scr[:, pad + w:wp, :] = col_strip
        xp_scr[pad:pad + h, pad:pad + w, :] = x_ref[0]

    row0 = hb * th
    if th % 8 == 0:
        row0 = pl.multiple_of(row0, 8)

    # ---- Stage 1+2 fused: depthwise taps folded into the pointwise matmul.
    # Each tap is a shifted window of the padded image times a combined (C_in, C_out)
    # weight -> MXU matmul, f32 accumulation.  No VPU MAD chain, no z intermediate.
    wt = wt_ref[...]                                   # (K*K, C_in, C_out), loaded once
    acc = jnp.zeros((th * w_out, c_out), f32)
    for ky in range(k):
        for kx in range(k):
            win = xp_scr[pl.ds(row0 + ky * dil, th), kx * dil:kx * dil + w_out, :]
            acc = acc + jnp.dot(win.reshape(th * w_out, c_in).astype(f32),
                                wt[ky * k + kx],
                                preferred_element_type=f32)

    # Unnormalized y tile + streamed per-channel partial BN statistics for this tile.
    y_ref[...] = acc.reshape(1, th, w_out, c_out)
    psum_ref[...] = jnp.sum(acc, axis=0, keepdims=True).reshape(1, 1, 1, c_out)
    psq_ref[...] = jnp.sum(acc * acc, axis=0, keepdims=True).reshape(1, 1, 1, c_out)


def _norm_kernel(y_ref, sc_ref, bi_ref, o_ref):
    """Lane-dense per-channel scale+bias (BN folded): o = y * scale + bias."""
    o_ref[...] = (y_ref[...] * sc_ref[...] + bi_ref[...]).astype(o_ref.dtype)


def dil_conv(x, w_dw, w_pw, *, stride=1, padding=2, dilation=2, eps=1e-5, block_rows=512):
    """DilConv forward: dilated depthwise conv -> 1x1 pointwise conv -> pseudoBatchNorm.

    Args:
      x:    (N, C_in, H, W)      float, NCHW (PyTorch layout).
      w_dw: (C_in, 1, K, K)      depthwise (groups=C_in) dilated conv weight.
      w_pw: (C_out, C_in, 1, 1)  pointwise 1x1 conv weight.
    Returns:
      (N, C_out, H_out, W_out)   NCHW.
    """
    if stride != 1:
        # TODO(synk): stride=2 (reduction cells) needs strided depthwise windows in-kernel.
        raise NotImplementedError("dil_conv Pallas kernel currently supports stride=1 only")

    n, c_in, h, w = x.shape
    c_out = w_pw.shape[0]
    k = w_dw.shape[-1]
    h_out = h + 2 * padding - dilation * (k - 1)
    w_out = w + 2 * padding - dilation * (k - 1)
    hp, wp = h + 2 * padding, w + 2 * padding
    m = n * h_out * w_out

    # Layout plumbing outside the kernel (cheap XLA ops): channels-last activations, and
    # per-tap combined weights W_t[c, o] = w_dw[c, ky, kx] * w_pw[o, c] (depthwise folded
    # into the pointwise matmul).  TODO(synk): `convolutions(...)` assumed bias-free
    # (any conv bias would be absorbed by the batch-stat mean subtraction anyway).
    x_nhwc = jnp.transpose(x, (0, 2, 3, 1))                        # (N, H, W, C_in)
    wdw_t = jnp.transpose(w_dw.reshape(c_in, k * k), (1, 0))       # (K*K, C_in)
    wpw_t = jnp.transpose(w_pw.reshape(c_out, c_in), (1, 0))       # (C_in, C_out)
    w_taps = (wdw_t[:, :, None] * wpw_t[None, :, :]).astype(jnp.float32)  # (K*K, C_in, C_out)

    # Output-row blocking: ~block_rows flattened rows per grid step (multiple-of-8 friendly).
    th = _largest_divisor_at_most(h_out, max(1, block_rows // max(w_out, 1)))
    n_hb = h_out // th

    conv_kernel = functools.partial(
        _dw_pw_kernel, h=h, w=w, c_in=c_in, c_out=c_out, k=k, dil=dilation,
        pad=padding, th=th, w_out=w_out, hp=hp, wp=wp)

    # ---- Pass 1: conv (heavy) + streamed partial BN stats.
    y, psum, psq = pl.pallas_call(
        conv_kernel,
        out_shape=(
            jax.ShapeDtypeStruct((n, h_out, w_out, c_out), jnp.float32),
            jax.ShapeDtypeStruct((n, n_hb, 1, c_out), jnp.float32),
            jax.ShapeDtypeStruct((n, n_hb, 1, c_out), jnp.float32),
        ),
        grid_spec=pltpu.PrefetchScalarGridSpec(
            num_scalar_prefetch=0,
            grid=(n, n_hb),
            in_specs=[
                # Full image per n (re-used across hb: block index unchanged -> no re-DMA).
                pl.BlockSpec((1, h, w, c_in), lambda i, j: (i, 0, 0, 0)),
                # Combined weights: resident untiled block.
                pl.BlockSpec((k * k, c_in, c_out), lambda i, j: (0, 0, 0)),
            ],
            out_specs=(
                pl.BlockSpec((1, th, w_out, c_out), lambda i, j: (i, j, 0, 0)),
                pl.BlockSpec((1, 1, 1, c_out), lambda i, j: (i, j, 0, 0)),
                pl.BlockSpec((1, 1, 1, c_out), lambda i, j: (i, j, 0, 0)),
            ),
            scratch_shapes=[pltpu.VMEM((hp, wp, c_in), x.dtype)],   # padded image (input dtype)
        ),
        compiler_params=pltpu.CompilerParams(
            # N is fully independent -> "parallel" (v7x shards it across both TCs).
            # hb is "arbitrary" only because the padded-image scratch is built at hb==0.
            dimension_semantics=("parallel", "arbitrary"),
            # Leaves headroom on v7x's 64 MiB; raise toward ~100 MiB on v5e/v6e if desired.
            vmem_limit_bytes=48 * 1024 * 1024,
        ),
    )(x_nhwc, w_taps)

    # ---- Reduce streamed partial stats and fold pseudoBatchNorm (no affine, no running
    # stats) into a single per-channel scale + bias.  Tiny (C_out,) XLA ops.
    m_f = jnp.float32(m)
    s = jnp.sum(psum, axis=(0, 1, 2))
    sq = jnp.sum(psq, axis=(0, 1, 2))
    mean = s / m_f
    var = jnp.maximum(sq / m_f - mean * mean, 0.0)   # clamp: single-pass var cancellation
    inv = jax.lax.rsqrt(var + jnp.float32(eps))
    scale = inv
    bias = -mean * inv

    # ---- Pass 2: lane-dense normalization.  View y (free row-major reshape) as
    # (M/RL, RL*C_out) with RL*C_out = 128 lanes -> unmasked, full-width stores.
    if 0 < c_out <= 128 and 128 % c_out == 0 and m % (128 // c_out) == 0:
        rl = 128 // c_out
    else:
        rl = 1
    rows = m // rl
    lanes = rl * c_out
    y2 = y.reshape(rows, lanes)
    sc = jnp.tile(scale, (rl,)).reshape(1, lanes)
    bi = jnp.tile(bias, (rl,)).reshape(1, lanes)

    if rows <= 1024:
        tm = rows
    else:
        tm = _largest_divisor_at_most(rows, 1024)
        if tm % 8 != 0:          # keep sublane-aligned blocks; fall back to one block
            tm = rows

    yn = pl.pallas_call(
        _norm_kernel,
        out_shape=jax.ShapeDtypeStruct((rows, lanes), x.dtype),
        grid_spec=pltpu.PrefetchScalarGridSpec(
            num_scalar_prefetch=0,
            grid=(rows // tm,),
            in_specs=[
                pl.BlockSpec((tm, lanes), lambda i: (i, 0)),
                pl.BlockSpec((1, lanes), lambda i: (0, 0)),
                pl.BlockSpec((1, lanes), lambda i: (0, 0)),
            ],
            out_specs=pl.BlockSpec((tm, lanes), lambda i: (i, 0)),
        ),
        compiler_params=pltpu.CompilerParams(
            dimension_semantics=("parallel",),
            vmem_limit_bytes=48 * 1024 * 1024,
        ),
    )(y2, sc, bi)

    out = yn.reshape(n, h_out, w_out, c_out)          # free reshape
    return jnp.transpose(out, (0, 3, 1, 2))           # back to NCHW


def _reference(x, w_dw, w_pw, *, padding, dilation, eps):
    """Pure-JAX reference of the same forward pass (f32, HIGHEST precision)."""
    n, c_in, h, w = x.shape
    k = w_dw.shape[-1]
    h_out = h + 2 * padding - dilation * (k - 1)
    w_out = w + 2 * padding - dilation * (k - 1)
    xp = jnp.pad(x, ((0, 0), (0, 0), (padding, padding), (padding, padding)))
    z = jnp.zeros((n, c_in, h_out, w_out), jnp.float32)
    for ky in range(k):
        for kx in range(k):
            win = xp[:, :, ky * dilation:ky * dilation + h_out,
                     kx * dilation:kx * dilation + w_out]
            z = z + win * w_dw[:, 0, ky, kx][None, :, None, None]
    y = jnp.einsum("nchw,oc->nohw", z, w_pw[:, :, 0, 0],
                   precision=jax.lax.Precision.HIGHEST)
    mean = jnp.mean(y, axis=(0, 2, 3), keepdims=True)
    var = jnp.mean((y - mean) ** 2, axis=(0, 2, 3), keepdims=True)
    return (y - mean) * jax.lax.rsqrt(var + eps)


if __name__ == "__main__":
    key = jax.random.PRNGKey(0)
    k1, k2, k3 = jax.random.split(key, 3)

    N, C_IN, C_OUT, H, W = 2, 4, 8, 16, 16
    K, STRIDE, DIL = 3, 1, 2
    PAD = DIL * (K - 1) // 2        # = 2: preserves spatial size (DARTS/NDS convention)

    x = jax.random.normal(k1, (N, C_IN, H, W), dtype=jnp.float32)
    w_dw = 0.5 * jax.random.normal(k2, (C_IN, 1, K, K), dtype=jnp.float32)
    w_pw = 0.5 * jax.random.normal(k3, (C_OUT, C_IN, 1, 1), dtype=jnp.float32)

    # block_rows=128 so the toy shape exercises the multi-row-block + streamed-stats path
    # (production default is ~512 flattened rows per grid step).
    y = dil_conv(x, w_dw, w_pw, stride=STRIDE, padding=PAD, dilation=DIL, block_rows=128)
    jax.block_until_ready(y)

    ref = _reference(x, w_dw, w_pw, padding=PAD, dilation=DIL, eps=1e-5)
    assert y.shape == ref.shape == (N, C_OUT, H, W), y.shape
    max_err = float(jnp.max(jnp.abs(y - ref)))
    assert max_err < 2e-3, f"max abs error vs reference: {max_err}"
    print("KERNEL_OK")
</pallas_src>

<mosaic_0001>
module attributes {stable_mosaic.version = 11 : i64} {
  func.func @_dw_pw_kernel(%arg0: i32, %arg1: i32, %arg2: memref<1x16x16x4xf32, #tpu.memory_space<vmem>>, %arg3: memref<9x4x8xf32, #tpu.memory_space<vmem>>, %arg4: memref<1x8x16x8xf32, #tpu.memory_space<vmem>>, %arg5: memref<1x1x1x8xf32, #tpu.memory_space<vmem>>, %arg6: memref<1x1x1x8xf32, #tpu.memory_space<vmem>>, %arg7: memref<20x20x4xf32, #tpu.memory_space<vmem>>) attributes {dimension_semantics = [#tpu.dimension_semantics<parallel>, #tpu.dimension_semantics<arbitrary>], iteration_bounds = array<i64: 2, 2>, scalar_prefetch = 0 : i64, scratch_operands = 1 : i64, tpu.core_type = #tpu.core_type<tc>, window_params = [{transform_indices = @transform_0, window_bounds = array<i64: 1, 16, 16, 4>}, {pipeline_mode = #tpu.pipeline_mode<synchronous>, transform_indices = @transform_1, window_bounds = array<i64: 9, 4, 8>}, {transform_indices = @transform_2, window_bounds = array<i64: 1, 8, 16, 8>}, {transform_indices = @transform_3, window_bounds = array<i64: 1, 1, 1, 8>}, {transform_indices = @transform_4, window_bounds = array<i64: 1, 1, 1, 8>}]} {
    %c0_i32 = arith.constant 0 : i32
    %0 = arith.cmpi eq, %arg1, %c0_i32 : i32
    %1 = arith.extui %0 : i1 to i32
    %c0_i32_0 = arith.constant 0 : i32
    %2 = arith.cmpi ne, %1, %c0_i32_0 : i32
    scf.if %2 {
      %cst_49 = arith.constant 0.000000e+00 : f32
      %90 = vector.broadcast %cst_49 : f32 to vector<2x20x4xf32>
      %c0_50 = arith.constant 0 : index
      %c0_51 = arith.constant 0 : index
      %c0_52 = arith.constant 0 : index
      %91 = vector.load %arg7[%c0_50, %c0_51, %c0_52] : memref<20x20x4xf32, #tpu.memory_space<vmem>>, vector<2x20x4xf32>
      tpu.vector_store %arg7[%c0_50, %c0_51, %c0_52], %90 {strides = array<i32>} : memref<20x20x4xf32, #tpu.memory_space<vmem>>, vector<2x20x4xf32>,
      %c18 = arith.constant 18 : index
      %c0_53 = arith.constant 0 : index
      %c0_54 = arith.constant 0 : index
      %92 = vector.load %arg7[%c18, %c0_53, %c0_54] : memref<20x20x4xf32, #tpu.memory_space<vmem>>, vector<2x20x4xf32>
      tpu.vector_store %arg7[%c18, %c0_53, %c0_54], %90 {strides = array<i32>} : memref<20x20x4xf32, #tpu.memory_space<vmem>>, vector<2x20x4xf32>,
      %cst_55 = arith.constant 0.000000e+00 : f32
      %93 = vector.broadcast %cst_55 : f32 to vector<20x2x4xf32>
      %c0_56 = arith.constant 0 : index
      %c0_57 = arith.constant 0 : index
      %c0_58 = arith.constant 0 : index
      %94 = vector.load %arg7[%c0_56, %c0_57, %c0_58] : memref<20x20x4xf32, #tpu.memory_space<vmem>>, vector<20x2x4xf32>
      tpu.vector_store %arg7[%c0_56, %c0_57, %c0_58], %93 {strides = array<i32>} : memref<20x20x4xf32, #tpu.memory_space<vmem>>, vector<20x2x4xf32>,
      %c0_59 = arith.constant 0 : index
      %c18_60 = arith.constant 18 : index
      %c0_61 = arith.constant 0 : index
      %95 = vector.load %arg7[%c0_59, %c18_60, %c0_61] : memref<20x20x4xf32, #tpu.memory_space<vmem>>, vector<20x2x4xf32>
      tpu.vector_store %arg7[%c0_59, %c18_60, %c0_61], %93 {strides = array<i32>} : memref<20x20x4xf32, #tpu.memory_space<vmem>>, vector<20x2x4xf32>,
      %c0_62 = arith.constant 0 : index
      %c0_63 = arith.constant 0 : index
      %c0_64 = arith.constant 0 : index
      %c0_65 = arith.constant 0 : index
      %96 = vector.load %arg2[%c0_62, %c0_63, %c0_64, %c0_65] : memref<1x16x16x4xf32, #tpu.memory_space<vmem>>, vector<1x16x16x4xf32>
      %97 = vector.shape_cast %96 : vector<1x16x16x4xf32> to vector<16x16x4xf32>
      %c2_66 = arith.constant 2 : index
      %c2_67 = arith.constant 2 : index
      %c0_68 = arith.constant 0 : index
      %98 = vector.load %arg7[%c2_66, %c2_67, %c0_68] : memref<20x20x4xf32, #tpu.memory_space<vmem>>, vector<16x16x4xf32>
      tpu.vector_store %arg7[%c2_66, %c2_67, %c0_68], %97 {strides = array<i32>} : memref<20x20x4xf32, #tpu.memory_space<vmem>>, vector<16x16x4xf32>,
    } else {
    }
    %c8_i32 = arith.constant 8 : i32
    %3 = arith.muli %arg1, %c8_i32 : i32
    %4 = tpu.assume_multiple %3, 8 : i32
    %c0 = arith.constant 0 : index
    %c0_1 = arith.constant 0 : index
    %c0_2 = arith.constant 0 : index
    %5 = vector.load %arg3[%c0, %c0_1, %c0_2] : memref<9x4x8xf32, #tpu.memory_space<vmem>>, vector<9x4x8xf32>
    %cst = arith.constant 0.000000e+00 : f32
    %6 = vector.broadcast %cst : f32 to vector<128x8xf32>
    %c0_i32_3 = arith.constant 0 : i32
    %7 = arith.addi %4, %c0_i32_3 : i32
    %8 = arith.index_cast %7 : i32 to index
    %c0_4 = arith.constant 0 : index
    %c0_5 = arith.constant 0 : index
    %9 = vector.load %arg7[%8, %c0_4, %c0_5] : memref<20x20x4xf32, #tpu.memory_space<vmem>>, vector<8x16x4xf32>
    %10 = vector.shape_cast %9 : vector<8x16x4xf32> to vector<128x4xf32>
    %11 = vector.extract_strided_slice %5 {offsets = [0, 0, 0], sizes = [1, 4, 8], strides = [1, 1, 1]} : vector<9x4x8xf32> to vector<1x4x8xf32>
    %12 = vector.shape_cast %11 : vector<1x4x8xf32> to vector<4x8xf32>
    %cst_6 = arith.constant dense<0.000000e+00> : vector<128x8xf32>
    %13 = tpu.matmul %10, %12, %cst_6 {dimension_numbers = #tpu.dot_dimension_numbers<[1], [0], [0], [1], [0, 0, 1, 1], [], []>} : vector<128x4xf32>, vector<4x8xf32>, vector<128x8xf32> -> vector<128x8xf32>
    %14 = arith.addf %6, %13 : vector<128x8xf32>
    %c0_i32_7 = arith.constant 0 : i32
    %15 = arith.addi %4, %c0_i32_7 : i32
    %16 = arith.index_cast %15 : i32 to index
    %c2 = arith.constant 2 : index
    %c0_8 = arith.constant 0 : index
    %17 = vector.load %arg7[%16, %c2, %c0_8] : memref<20x20x4xf32, #tpu.memory_space<vmem>>, vector<8x16x4xf32>
    %18 = vector.shape_cast %17 : vector<8x16x4xf32> to vector<128x4xf32>
    %19 = vector.extract_strided_slice %5 {offsets = [1, 0, 0], sizes = [1, 4, 8], strides = [1, 1, 1]} : vector<9x4x8xf32> to vector<1x4x8xf32>
    %20 = vector.shape_cast %19 : vector<1x4x8xf32> to vector<4x8xf32>
    %cst_9 = arith.constant dense<0.000000e+00> : vector<128x8xf32>
    %21 = tpu.matmul %18, %20, %cst_9 {dimension_numbers = #tpu.dot_dimension_numbers<[1], [0], [0], [1], [0, 0, 1, 1], [], []>} : vector<128x4xf32>, vector<4x8xf32>, vector<128x8xf32> -> vector<128x8xf32>
    %22 = arith.addf %14, %21 : vector<128x8xf32>
    %c0_i32_10 = arith.constant 0 : i32
    %23 = arith.addi %4, %c0_i32_10 : i32
    %24 = arith.index_cast %23 : i32 to index
    %c4 = arith.constant 4 : index
    %c0_11 = arith.constant 0 : index
    %25 = vector.load %arg7[%24, %c4, %c0_11] : memref<20x20x4xf32, #tpu.memory_space<vmem>>, vector<8x16x4xf32>
    %26 = vector.shape_cast %25 : vector<8x16x4xf32> to vector<128x4xf32>
    %27 = vector.extract_strided_slice %5 {offsets = [2, 0, 0], sizes = [1, 4, 8], strides = [1, 1, 1]} : vector<9x4x8xf32> to vector<1x4x8xf32>
    %28 = vector.shape_cast %27 : vector<1x4x8xf32> to vector<4x8xf32>
    %cst_12 = arith.constant dense<0.000000e+00> : vector<128x8xf32>
    %29 = tpu.matmul %26, %28, %cst_12 {dimension_numbers = #tpu.dot_dimension_numbers<[1], [0], [0], [1], [0, 0, 1, 1], [], []>} : vector<128x4xf32>, vector<4x8xf32>, vector<128x8xf32> -> vector<128x8xf32>
    %30 = arith.addf %22, %29 : vector<128x8xf32>
    %c2_i32 = arith.constant 2 : i32
    %31 = arith.addi %4, %c2_i32 : i32
    %32 = arith.index_cast %31 : i32 to index
    %c0_13 = arith.constant 0 : index
    %c0_14 = arith.constant 0 : index
    %33 = vector.load %arg7[%32, %c0_13, %c0_14] : memref<20x20x4xf32, #tpu.memory_space<vmem>>, vector<8x16x4xf32>
    %34 = vector.shape_cast %33 : vector<8x16x4xf32> to vector<128x4xf32>
    %35 = vector.extract_strided_slice %5 {offsets = [3, 0, 0], sizes = [1, 4, 8], strides = [1, 1, 1]} : vector<9x4x8xf32> to vector<1x4x8xf32>
    %36 = vector.shape_cast %35 : vector<1x4x8xf32> to vector<4x8xf32>
    %cst_15 = arith.constant dense<0.000000e+00> : vector<128x8xf32>
    %37 = tpu.matmul %34, %36, %cst_15 {dimension_numbers = #tpu.dot_dimension_numbers<[1], [0], [0], [1], [0, 0, 1, 1], [], []>} : vector<128x4xf32>, vector<4x8xf32>, vector<128x8xf32> -> vector<128x8xf32>
    %38 = arith.addf %30, %37 : vector<128x8xf32>
    %c2_i32_16 = arith.constant 2 : i32
    %39 = arith.addi %4, %c2_i32_16 : i32
    %40 = arith.index_cast %39 : i32 to index
    %c2_17 = arith.constant 2 : index
    %c0_18 = arith.constant 0 : index
    %41 = vector.load %arg7[%40, %c2_17, %c0_18] : memref<20x20x4xf32, #tpu.memory_space<vmem>>, vector<8x16x4xf32>
    %42 = vector.shape_cast %41 : vector<8x16x4xf32> to vector<128x4xf32>
    %43 = vector.extract_strided_slice %5 {offsets = [4, 0, 0], sizes = [1, 4, 8], strides = [1, 1, 1]} : vector<9x4x8xf32> to vector<1x4x8xf32>
    %44 = vector.shape_cast %43 : vector<1x4x8xf32> to vector<4x8xf32>
    %cst_19 = arith.constant dense<0.000000e+00> : vector<128x8xf32>
    %45 = tpu.matmul %42, %44, %cst_19 {dimension_numbers = #tpu.dot_dimension_numbers<[1], [0], [0], [1], [0, 0, 1, 1], [], []>} : vector<128x4xf32>, vector<4x8xf32>, vector<128x8xf32> -> vector<128x8xf32>
    %46 = arith.addf %38, %45 : vector<128x8xf32>
    %c2_i32_20 = arith.constant 2 : i32
    %47 = arith.addi %4, %c2_i32_20 : i32
    %48 = arith.index_cast %47 : i32 to index
    %c4_21 = arith.constant 4 : index
    %c0_22 = arith.constant 0 : index
    %49 = vector.load %arg7[%48, %c4_21, %c0_22] : memref<20x20x4xf32, #tpu.memory_space<vmem>>, vector<8x16x4xf32>
    %50 = vector.shape_cast %49 : vector<8x16x4xf32> to vector<128x4xf32>
    %51 = vector.extract_strided_slice %5 {offsets = [5, 0, 0], sizes = [1, 4, 8], strides = [1, 1, 1]} : vector<9x4x8xf32> to vector<1x4x8xf32>
    %52 = vector.shape_cast %51 : vector<1x4x8xf32> to vector<4x8xf32>
    %cst_23 = arith.constant dense<0.000000e+00> : vector<128x8xf32>
    %53 = tpu.matmul %50, %52, %cst_23 {dimension_numbers = #tpu.dot_dimension_numbers<[1], [0], [0], [1], [0, 0, 1, 1], [], []>} : vector<128x4xf32>, vector<4x8xf32>, vector<128x8xf32> -> vector<128x8xf32>
    %54 = arith.addf %46, %53 : vector<128x8xf32>
    %c4_i32 = arith.constant 4 : i32
    %55 = arith.addi %4, %c4_i32 : i32
    %56 = arith.index_cast %55 : i32 to index
    %c0_24 = arith.constant 0 : index
    %c0_25 = arith.constant 0 : index
    %57 = vector.load %arg7[%56, %c0_24, %c0_25] : memref<20x20x4xf32, #tpu.memory_space<vmem>>, vector<8x16x4xf32>
    %58 = vector.shape_cast %57 : vector<8x16x4xf32> to vector<128x4xf32>
    %59 = vector.extract_strided_slice %5 {offsets = [6, 0, 0], sizes = [1, 4, 8], strides = [1, 1, 1]} : vector<9x4x8xf32> to vector<1x4x8xf32>
    %60 = vector.shape_cast %59 : vector<1x4x8xf32> to vector<4x8xf32>
    %cst_26 = arith.constant dense<0.000000e+00> : vector<128x8xf32>
    %61 = tpu.matmul %58, %60, %cst_26 {dimension_numbers = #tpu.dot_dimension_numbers<[1], [0], [0], [1], [0, 0, 1, 1], [], []>} : vector<128x4xf32>, vector<4x8xf32>, vector<128x8xf32> -> vector<128x8xf32>
    %62 = arith.addf %54, %61 : vector<128x8xf32>
    %c4_i32_27 = arith.constant 4 : i32
    %63 = arith.addi %4, %c4_i32_27 : i32
    %64 = arith.index_cast %63 : i32 to index
    %c2_28 = arith.constant 2 : index
    %c0_29 = arith.constant 0 : index
    %65 = vector.load %arg7[%64, %c2_28, %c0_29] : memref<20x20x4xf32, #tpu.memory_space<vmem>>, vector<8x16x4xf32>
    %66 = vector.shape_cast %65 : vector<8x16x4xf32> to vector<128x4xf32>
    %67 = vector.extract_strided_slice %5 {offsets = [7, 0, 0], sizes = [1, 4, 8], strides = [1, 1, 1]} : vector<9x4x8xf32> to vector<1x4x8xf32>
    %68 = vector.shape_cast %67 : vector<1x4x8xf32> to vector<4x8xf32>
    %cst_30 = arith.constant dense<0.000000e+00> : vector<128x8xf32>
    %69 = tpu.matmul %66, %68, %cst_30 {dimension_numbers = #tpu.dot_dimension_numbers<[1], [0], [0], [1], [0, 0, 1, 1], [], []>} : vector<128x4xf32>, vector<4x8xf32>, vector<128x8xf32> -> vector<128x8xf32>
    %70 = arith.addf %62, %69 : vector<128x8xf32>
    %c4_i32_31 = arith.constant 4 : i32
    %71 = arith.addi %4, %c4_i32_31 : i32
    %72 = arith.index_cast %71 : i32 to index
    %c4_32 = arith.constant 4 : index
    %c0_33 = arith.constant 0 : index
    %73 = vector.load %arg7[%72, %c4_32, %c0_33] : memref<20x20x4xf32, #tpu.memory_space<vmem>>, vector<8x16x4xf32>
    %74 = vector.shape_cast %73 : vector<8x16x4xf32> to vector<128x4xf32>
    %75 = vector.extract_strided_slice %5 {offsets = [8, 0, 0], sizes = [1, 4, 8], strides = [1, 1, 1]} : vector<9x4x8xf32> to vector<1x4x8xf32>
    %76 = vector.shape_cast %75 : vector<1x4x8xf32> to vector<4x8xf32>
    %cst_34 = arith.constant dense<0.000000e+00> : vector<128x8xf32>
    %77 = tpu.matmul %74, %76, %cst_34 {dimension_numbers = #tpu.dot_dimension_numbers<[1], [0], [0], [1], [0, 0, 1, 1], [], []>} : vector<128x4xf32>, vector<4x8xf32>, vector<128x8xf32> -> vector<128x8xf32>
    %78 = arith.addf %70, %77 : vector<128x8xf32>
    %79 = vector.shape_cast %78 : vector<128x8xf32> to vector<1x8x16x8xf32>
    %c0_35 = arith.constant 0 : index
    %c0_36 = arith.constant 0 : index
    %c0_37 = arith.constant 0 : index
    %c0_38 = arith.constant 0 : index
    %80 = vector.load %arg4[%c0_35, %c0_36, %c0_37, %c0_38] : memref<1x8x16x8xf32, #tpu.memory_space<vmem>>, vector<1x8x16x8xf32>
    tpu.vector_store %arg4[%c0_35, %c0_36, %c0_37, %c0_38], %79 {strides = array<i32>} : memref<1x8x16x8xf32, #tpu.memory_space<vmem>>, vector<1x8x16x8xf32>,
    %cst_39 = arith.constant dense<0.000000e+00> : vector<8xf32>
    %81 = vector.multi_reduction <add>, %78, %cst_39 [0] : vector<128x8xf32> to vector<8xf32>
    %82 = vector.shape_cast %81 : vector<8xf32> to vector<1x8xf32>
    %83 = vector.shape_cast %82 : vector<1x8xf32> to vector<1x1x1x8xf32>
    %c0_40 = arith.constant 0 : index
    %c0_41 = arith.constant 0 : index
    %c0_42 = arith.constant 0 : index
    %c0_43 = arith.constant 0 : index
    %84 = vector.load %arg5[%c0_40, %c0_41, %c0_42, %c0_43] : memref<1x1x1x8xf32, #tpu.memory_space<vmem>>, vector<1x1x1x8xf32>
    tpu.vector_store %arg5[%c0_40, %c0_41, %c0_42, %c0_43], %83 {strides = array<i32>} : memref<1x1x1x8xf32, #tpu.memory_space<vmem>>, vector<1x1x1x8xf32>,
    %85 = arith.mulf %78, %78 : vector<128x8xf32>
    %cst_44 = arith.constant dense<0.000000e+00> : vector<8xf32>
    %86 = vector.multi_reduction <add>, %85, %cst_44 [0] : vector<128x8xf32> to vector<8xf32>
    %87 = vector.shape_cast %86 : vector<8xf32> to vector<1x8xf32>
    %88 = vector.shape_cast %87 : vector<1x8xf32> to vector<1x1x1x8xf32>
    %c0_45 = arith.constant 0 : index
    %c0_46 = arith.constant 0 : index
    %c0_47 = arith.constant 0 : index
    %c0_48 = arith.constant 0 : index
    %89 = vector.load %arg6[%c0_45, %c0_46, %c0_47, %c0_48] : memref<1x1x1x8xf32, #tpu.memory_space<vmem>>, vector<1x1x1x8xf32>
    tpu.vector_store %arg6[%c0_45, %c0_46, %c0_47, %c0_48], %88 {strides = array<i32>} : memref<1x1x1x8xf32, #tpu.memory_space<vmem>>, vector<1x1x1x8xf32>,
    return
  }
  func.func @transform_0(%arg0: i32, %arg1: i32) -> (i32, i32, i32, i32) {
    %c0_i32 = arith.constant 0 : i32
    %c0_i32_0 = arith.constant 0 : i32
    %c0_i32_1 = arith.constant 0 : i32
    %c0_i32_2 = arith.constant 0 : i32
    return %arg0, %c0_i32, %c0_i32_0, %c0_i32_1 : i32, i32, i32, i32
  }
  func.func @transform_1(%arg0: i32, %arg1: i32) -> (i32, i32, i32) {
    %c0_i32 = arith.constant 0 : i32
    %c0_i32_0 = arith.constant 0 : i32
    %c0_i32_1 = arith.constant 0 : i32
    %c0_i32_2 = arith.constant 0 : i32
    return %c0_i32, %c0_i32_0, %c0_i32_1 : i32, i32, i32
  }
  func.func @transform_2(%arg0: i32, %arg1: i32) -> (i32, i32, i32, i32) {
    %c0_i32 = arith.constant 0 : i32
    %c0_i32_0 = arith.constant 0 : i32
    %c0_i32_1 = arith.constant 0 : i32
    return %arg0, %arg1, %c0_i32, %c0_i32_0 : i32, i32, i32, i32
  }
  func.func @transform_3(%arg0: i32, %arg1: i32) -> (i32, i32, i32, i32) {
    %c0_i32 = arith.constant 0 : i32
    %c0_i32_0 = arith.constant 0 : i32
    %c0_i32_1 = arith.constant 0 : i32
    return %arg0, %arg1, %c0_i32, %c0_i32_0 : i32, i32, i32, i32
  }
  func.func @transform_4(%arg0: i32, %arg1: i32) -> (i32, i32, i32, i32) {
    %c0_i32 = arith.constant 0 : i32
    %c0_i32_0 = arith.constant 0 : i32
    %c0_i32_1 = arith.constant 0 : i32
    return %arg0, %arg1, %c0_i32, %c0_i32_0 : i32, i32, i32, i32
  }
}

</mosaic_0001>

<llo_original>
// kernel: tpu_custom_call.1
$region0: #{tpu_custom_call.1}
  #allocation0 [shape = 'u32[]', space=smem, size = 0x4, offset = 0x4, fixed_abs, tag = 'smem constant byte address 0x4 - core index']
  #allocation1 [shape = 'u32[144,128]{1,0:T(1,128)}', space=vmem, size = 0x12000, scoped, tag = 'internal scratch']
  #allocation2 [shape = 'f32[20,20,4]{2,1,0:T(8,128)}', space=vmem, size = 0x3c000, scoped, tag = 'scratch operand']
  %s0 = inlined_call_operand.vmem [shape: f32[2,16,16,4], index: 0, kind: input, shape index: {}]
  %s1 = inlined_call_operand.vmem [shape: f32[9,4,8], index: 1, kind: input, shape index: {}]
  %s2 = inlined_call_operand.vmem [shape: f32[2,16,16,8], index: 2, kind: output, shape index: {0}]
  %s3 = inlined_call_operand.hbm [shape: f32[2,2,1,8], index: 3, kind: output, shape index: {1}]
  %s4 = inlined_call_operand.hbm [shape: f32[2,2,1,8], index: 4, kind: output, shape index: {2}]
  %5 = xla_tuple %s2, %s3, %s4
  %s6 = sld [smem:[#allocation0]]
  $region61: #{tpu_custom_call.1} parent=0
    _
  %s8 = ssub.s32 1, %s6
  %s9 = scalar_select 0, %s8, %s6
  $region1: #{tpu_custom_call.1} parent=0
    #allocation3 [shape = 'u8[1024]{0}', space=vmem, size = 0x400, scoped, tag = 'output window, operand 1']
    #allocation4 [shape = 's32[2]{0}', space=sflag, size = 0x8, scoped, tag = 'scoped memory for tpu_custom_call.1']
    #allocation5 [shape = 'u8[1024]{0}', space=vmem, size = 0x400, scoped, tag = 'output window, operand 2']
    #allocation6 [shape = 's32[2]{0}', space=sflag, size = 0x8, scoped, tag = 'scoped memory for tpu_custom_call.1']
    %10 = vsyncpa [#allocation4], 0
    %s11 = scalar_lea.sflag [#allocation4], 1
    %12 = vsyncpa %s11, 0
    %13 = vsyncpa [#allocation6], 0
    %s14 = scalar_lea.sflag [#allocation6], 1
    %15 = vsyncpa %s14, 0
    loop: start=0, step=1, limit=6
    $region2: #{tpu_custom_call.1} parent=1 // loop_pre_header
      _
    $region3: #{tpu_custom_call.1} parent=1 // loop_header
      %s17 = sphi 0, %s21
      %p18 = scmp.ge.s32.totalorder %s17, 6
      %s24 = sphi 0, %s36
      %s25 = sphi 0, %s32
      %s26 = sphi 0, %s24
      %s27 = sphi 0, %s25
      %s28 = sphi 0, %s26
      %s29 = sphi 0, %s27
      %s39 = sphi 0, %s41
      %s42 = sphi 0, %s39
      %s43 = sphi 0, %s42
      %s59 = sphi 0, %s43
      %s63 = sphi 0, %s63
      %s65 = sphi 0, %s63
      %s66 = sphi 0, %s65
      %s80 = sphi 0, %s66
      %s88 = sphi 0, %s90
      %s91 = sphi 0, %s88
      %s92 = sphi 0, %s91
      %s108 = sphi 0, %s92
      %s116 = sphi 0, %s118
      %s119 = sphi 0, %s116
      %s120 = sphi 0, %s119
      %s136 = sphi 0, %s120
      %s144 = sphi 0, %s146
      %s147 = sphi 0, %s144
      %s148 = sphi 0, %s147
      %s164 = sphi 0, %s148
    $region4: #{tpu_custom_call.1} parent=1 // loop_header_branch
      %20 = sbr.rel (%p18) target = $region8
    $region5: #{tpu_custom_call.1} parent=1 // loop_body
      %s22 = ssub.s32 %s17, 1
      %s23 = ssub.s32 %s17, 2
      %s30 = sadd.s32 1, %s25
      %p31 = scmp.ge.s32.totalorder %s30, 2
      %s32 = scalar_select %p31, 0, %s30
      %s33 = sadd.s32 1, %s24
      %s34 = scalar_select %p31, %s33, %s24
      %p35 = scmp.ge.s32.totalorder %s34, 2
      %s36 = scalar_select %p35, 0, %s34
      %s37 = ssub.s32 %s24, %s36
      %p38 = scmp.eq.s32.totalorder %s37, 0
      %s40 = sadd.s32 %s39, 1
      %s41 = scalar_select %p38, %s39, %s40
      %p44 = pneg %p38
      %p45 = scmp.eq.s32.totalorder %s17, 3
      %p46 = por %p44, %p45
      %p47 = scmp.ne.s32.totalorder %s39, %s42
      %p48 = scmp.eq.s32.totalorder %s17, 0
      %p49 = por %p47, %p48
      %p50 = scmp.ne.s32.totalorder %s39, %s42
      %p51 = scmp.eq.s32.totalorder %s22, 3
      %p52 = por %p50, %p51
      %p53 = scmp.ne.s32.totalorder %s42, %s43
      %p54 = scmp.eq.s32.totalorder %s22, 0
      %p55 = por %p53, %p54
      %p56 = scmp.ne.s32.totalorder %s42, %s43
      %p57 = scmp.eq.s32.totalorder %s23, 3
      %p58 = por %p56, %p57
      %p60 = scmp.ne.s32.totalorder %s43, %s59
      %p61 = scmp.eq.s32.totalorder %s23, 0
      %p62 = por %p60, %p61
      %s64 = sadd.s32 %s63, 1
      %p67 = scmp.eq.s32.totalorder %s17, 3
      %p68 = scmp.ne.s32.totalorder %s63, %s65
      %p69 = scmp.eq.s32.totalorder %s17, 0
      %p70 = por %p68, %p69
      %p71 = scmp.ne.s32.totalorder %s63, %s65
      %p72 = scmp.eq.s32.totalorder %s22, 3
      %p73 = por %p71, %p72
      %p74 = scmp.ne.s32.totalorder %s65, %s66
      %p75 = scmp.eq.s32.totalorder %s22, 0
      %p76 = por %p74, %p75
      %p77 = scmp.ne.s32.totalorder %s65, %s66
      %p78 = scmp.eq.s32.totalorder %s23, 3
      %p79 = por %p77, %p78
      %p81 = scmp.ne.s32.totalorder %s66, %s80
      %p82 = scmp.eq.s32.totalorder %s23, 0
      %p83 = por %p81, %p82
      %s84 = ssub.s32 %s24, %s36
      %s85 = ssub.s32 %s25, %s32
      %s86 = sor.u32 %s84, %s85
      %p87 = scmp.eq.s32.totalorder %s86, 0
      %s89 = sadd.s32 %s88, 1
      %s90 = scalar_select %p87, %s88, %s89
      %p93 = pneg %p87
      %p94 = scmp.eq.s32.totalorder %s17, 3
      %p95 = por %p93, %p94
      %p96 = scmp.ne.s32.totalorder %s88, %s91
      %p97 = scmp.eq.s32.totalorder %s17, 0
      %p98 = por %p96, %p97
      %p99 = scmp.ne.s32.totalorder %s88, %s91
      %p100 = scmp.eq.s32.totalorder %s22, 3
      %p101 = por %p99, %p100
      %p102 = scmp.ne.s32.totalorder %s91, %s92
      %p103 = scmp.eq.s32.totalorder %s22, 0
      %p104 = por %p102, %p103
      %p105 = scmp.ne.s32.totalorder %s91, %s92
      %p106 = scmp.eq.s32.totalorder %s23, 3
      %p107 = por %p105, %p106
      %p109 = scmp.ne.s32.totalorder %s92, %s108
      %p110 = scmp.eq.s32.totalorder %s23, 0
      %p111 = por %p109, %p110
      %s112 = ssub.s32 %s24, %s36
      %s113 = ssub.s32 %s25, %s32
      %s114 = sor.u32 %s112, %s113
      %p115 = scmp.eq.s32.totalorder %s114, 0
      %s117 = sadd.s32 %s116, 1
      %s118 = scalar_select %p115, %s116, %s117
      %p121 = pneg %p115
      %p122 = scmp.eq.s32.totalorder %s17, 3
      %p123 = por %p121, %p122
      %p124 = scmp.ne.s32.totalorder %s116, %s119
      %p125 = scmp.eq.s32.totalorder %s17, 0
      %p126 = por %p124, %p125
      %p127 = scmp.ne.s32.totalorder %s116, %s119
      %p128 = scmp.eq.s32.totalorder %s22, 3
      %p129 = por %p127, %p128
      %p130 = scmp.ne.s32.totalorder %s119, %s120
      %p131 = scmp.eq.s32.totalorder %s22, 0
      %p132 = por %p130, %p131
      %p133 = scmp.ne.s32.totalorder %s119, %s120
      %p134 = scmp.eq.s32.totalorder %s23, 3
      %p135 = por %p133, %p134
      %p137 = scmp.ne.s32.totalorder %s120, %s136
      %p138 = scmp.eq.s32.totalorder %s23, 0
      %p139 = por %p137, %p138
      %s140 = ssub.s32 %s24, %s36
      %s141 = ssub.s32 %s25, %s32
      %s142 = sor.u32 %s140, %s141
      %p143 = scmp.eq.s32.totalorder %s142, 0
      %s145 = sadd.s32 %s144, 1
      %s146 = scalar_select %p143, %s144, %s145
      %p149 = pneg %p143
      %p150 = scmp.eq.s32.totalorder %s17, 3
      %p151 = por %p149, %p150
      %p152 = scmp.ne.s32.totalorder %s144, %s147
      %p153 = scmp.eq.s32.totalorder %s17, 0
      %p154 = por %p152, %p153
      %p155 = scmp.ne.s32.totalorder %s144, %s147
      %p156 = scmp.eq.s32.totalorder %s22, 3
      %p157 = por %p155, %p156
      %p158 = scmp.ne.s32.totalorder %s147, %s148
      %p159 = scmp.eq.s32.totalorder %s22, 0
      %p160 = por %p158, %p159
      %p161 = scmp.ne.s32.totalorder %s147, %s148
      %p162 = scmp.eq.s32.totalorder %s23, 3
      %p163 = por %p161, %p162
      %p165 = scmp.ne.s32.totalorder %s148, %s164
      %p166 = scmp.eq.s32.totalorder %s23, 0
      %p167 = por %p165, %p166
      %p168 = scmp.le.s32.totalorder 1, %s17
      %p169 = scmp.lt.s32.totalorder %s17, 5
      %p170 = pnand %p168, %p169
      %p171 = pneg %p170
      // Predicated region
      $region9: #{tpu_custom_call.1} parent=5 // pred_check
        _
      $region10: #{tpu_custom_call.1} parent=5 // pred_check_branch
        %173 = sbr.rel (%p170) target = $region12
      $region11: #{tpu_custom_call.1} parent=5 // pred_region
        %s174 = ssub.s32 %s17, 1
        // Predicated region
        $region13: #{tpu_custom_call.1} parent=11 // pred_check
          %p175 = pneg %p76
        $region14: #{tpu_custom_call.1} parent=11 // pred_check_branch
          %177 = sbr.rel (%p175) target = $region16
        $region15: #{tpu_custom_call.1} parent=11 // pred_region
          _
        $region16: #{tpu_custom_call.1} parent=11 // pred_fallthru
          _
      $region12: #{tpu_custom_call.1} parent=5 // pred_fallthru
        _
      %p178 = scmp.lt.s32.totalorder %s17, 4
      // Predicated region
      $region17: #{tpu_custom_call.1} parent=5 // pred_check
        %p179 = pneg %p178
      $region18: #{tpu_custom_call.1} parent=5 // pred_check_branch
        %181 = sbr.rel (%p179) target = $region20
      $region19: #{tpu_custom_call.1} parent=5 // pred_region
        // Predicated region
        $region21: #{tpu_custom_call.1} parent=19 // pred_check
          %p182 = pneg %p49
        $region22: #{tpu_custom_call.1} parent=19 // pred_check_branch
          %184 = sbr.rel (%p182) target = $region24
        $region23: #{tpu_custom_call.1} parent=19 // pred_region
          %p185 = scmp.lt.s32.totalorder %s24, 1
          %s186 = scalar_select %p185, %s24, 1
          %s187 = smul.addr %s186, 32
          %s188 = smul.addr %s187, 8
          %s189 = scalar_lea.vmem %s0, %s188
        $region24: #{tpu_custom_call.1} parent=19 // pred_fallthru
          _
      $region20: #{tpu_custom_call.1} parent=5 // pred_fallthru
        _
      %p190 = scmp.le.s32.totalorder 1, %s17
      %p191 = scmp.lt.s32.totalorder %s17, 5
      %p192 = pnand %p190, %p191
      %p193 = pneg %p192
      // Predicated region
      $region25: #{tpu_custom_call.1} parent=5 // pred_check
        _
      $region26: #{tpu_custom_call.1} parent=5 // pred_check_branch
        %195 = sbr.rel (%p192) target = $region28
      $region27: #{tpu_custom_call.1} parent=5 // pred_region
        %s196 = ssub.s32 %s17, 1
        %p197 = scmp.lt.s32.totalorder %s26, 1
        %s198 = scalar_select %p197, %s26, 1
        %s199 = smul.addr %s198, 32
        %s200 = smul.addr %s199, 8
        %s201 = scalar_lea.vmem %s0, %s200
        %p202 = pneg %p55
        %p203 = pneg %p52
        %p204 = pneg %p76
        %p205 = pneg %p73
        %p206 = pneg %p104
        %p207 = pneg %p101
        %s208 = smul.u32 8, %s27
        %p209 = scmp.lt.s32.totalorder %s26, 1
        %s210 = scalar_select %p209, %s26, 1
        %p211 = scmp.lt.s32.totalorder %s208, 15
        %s212 = scalar_select %p211, %s208, 15
        %s213 = smul.addr %s212, 2
        %s214 = smul.addr %s210, 32
        %s215 = sadd.s32 %s213, %s214
        %s216 = smul.addr %s215, 8
        %s217 = scalar_lea.vmem %s2, %s216
        %p218 = pneg %p132
        %p219 = pneg %p129
        %s220 = sand.u32 %s119, 1
        %s221 = scalar_lea.sflag [#allocation4], %s220
        %s222 = sand.u32 %s119, 1
        %s223 = scalar_lea.vmem [#allocation3], %s222
        %p224 = pneg %p160
        %p225 = pneg %p157
        %s226 = sand.u32 %s147, 1
        %s227 = scalar_lea.sflag [#allocation6], %s226
        %s228 = sand.u32 %s147, 1
        %s229 = scalar_lea.vmem [#allocation5], %s228
        %p230 = scmp.lt.s32.totalorder %s26, 1
        %s231 = scalar_select %p230, %s26, 1
        %s232 = smul.addr %s231, 32
        %s233 = smul.addr %s232, 8
        %s234 = scalar_lea.vmem %s0, %s233
        %s235 = smul.u32 8, %s27
        %p236 = scmp.lt.s32.totalorder %s26, 1
        %s237 = scalar_select %p236, %s26, 1
        %p238 = scmp.lt.s32.totalorder %s235, 15
        %s239 = scalar_select %p238, %s235, 15
        %s240 = smul.addr %s239, 2
        %s241 = smul.addr %s237, 32
        %s242 = sadd.s32 %s240, %s241
        %s243 = smul.addr %s242, 8
        %s244 = scalar_lea.vmem %s2, %s243
        %s245 = smul.u32 8, %s27
        %p246 = scmp.eq.s32.totalorder %s27, 0
        // Predicated region
        $region29: #{tpu_custom_call.1} parent=27 // pred_check
          %p247 = pneg %p246
        $region30: #{tpu_custom_call.1} parent=27 // pred_check_branch
          %249 = sbr.rel (%p247) target = $region32
        $region31: #{tpu_custom_call.1} parent=27 // pred_region
          %vm250 = vcmask 31744
          %251 = vst.msk [vmem:[#allocation2] sm:$0xff] %vm250, 0.0
          %252 = vst.msk [vmem:[#allocation2 + $0x8] sm:$0xff] %vm250, 0.0
          %vm253 = vcmask 27648
          %254 = vst.msk [vmem:[#allocation2 + $0x10] sm:$0xf] %vm253, 0.0
          %255 = vst.msk [vmem:[#allocation2 + $0x18] sm:$0xff] %vm250, 0.0
          %256 = vst.msk [vmem:[#allocation2 + $0x20] sm:$0xff] %vm250, 0.0
          %257 = vst.msk [vmem:[#allocation2 + $0x28] sm:$0xf] %vm253, 0.0
          %s258 = scalar_lea.vmem [#allocation2], 432
          %259 = vst.msk [vmem:[%s258] sm:$0xff] %vm250, 0.0
          %260 = vst.msk [vmem:[%s258 + $0x8] sm:$0xff] %vm250, 0.0
          %261 = vst.msk [vmem:[%s258 + $0x10] sm:$0xf] %vm253, 0.0
          %262 = vst.msk [vmem:[%s258 + $0x18] sm:$0xff] %vm250, 0.0
          %263 = vst.msk [vmem:[%s258 + $0x20] sm:$0xff] %vm250, 0.0
          %264 = vst.msk [vmem:[%s258 + $0x28] sm:$0xf] %vm253, 0.0
          %vm265 = vcmask 25600
          %266 = vst.msk [vmem:[#allocation2] sm:$0x3] %vm265, 0.0
          %267 = vst.msk [vmem:[#allocation2 + $0x18] sm:$0x3] %vm265, 0.0
          %268 = vst.msk [vmem:[#allocation2 + $0x30] sm:$0x3] %vm265, 0.0
          %269 = vst.msk [vmem:[#allocation2 + $0x48] sm:$0x3] %vm265, 0.0
          %270 = vst.msk [vmem:[#allocation2 + $0x60] sm:$0x3] %vm265, 0.0
          %271 = vst.msk [vmem:[#allocation2 + $0x78] sm:$0x3] %vm265, 0.0
          %272 = vst.msk [vmem:[#allocation2 + $0x90] sm:$0x3] %vm265, 0.0
          %273 = vst.msk [vmem:[#allocation2 + $0xa8] sm:$0x3] %vm265, 0.0
          %274 = vst.msk [vmem:[#allocation2 + $0xc0] sm:$0x3] %vm265, 0.0
          %275 = vst.msk [vmem:[#allocation2 + $0xd8] sm:$0x3] %vm265, 0.0
          %276 = vst.msk [vmem:[#allocation2 + $0xf0] sm:$0x3] %vm265, 0.0
          %277 = vst.msk [vmem:[#allocation2 + $0x108] sm:$0x3] %vm265, 0.0
          %278 = vst.msk [vmem:[#allocation2 + $0x120] sm:$0x3] %vm265, 0.0
          %279 = vst.msk [vmem:[#allocation2 + $0x138] sm:$0x3] %vm265, 0.0
          %280 = vst.msk [vmem:[#allocation2 + $0x150] sm:$0x3] %vm265, 0.0
          %281 = vst.msk [vmem:[#allocation2 + $0x168] sm:$0x3] %vm265, 0.0
          %282 = vst.msk [vmem:[#allocation2 + $0x180] sm:$0x3] %vm265, 0.0
          %283 = vst.msk [vmem:[#allocation2 + $0x198] sm:$0x3] %vm265, 0.0
          %284 = vst.msk [vmem:[#allocation2 + $0x1b0] sm:$0x3] %vm265, 0.0
          %285 = vst.msk [vmem:[#allocation2 + $0x1c8] sm:$0x3] %vm265, 0.0
          %286 = vst.msk [vmem:[#allocation2 + $0x12] sm:$0x3] %vm265, 0.0
          %287 = vst.msk [vmem:[#allocation2 + $0x2a] sm:$0x3] %vm265, 0.0
          %288 = vst.msk [vmem:[#allocation2 + $0x42] sm:$0x3] %vm265, 0.0
          %289 = vst.msk [vmem:[#allocation2 + $0x5a] sm:$0x3] %vm265, 0.0
          %290 = vst.msk [vmem:[#allocation2 + $0x72] sm:$0x3] %vm265, 0.0
          %291 = vst.msk [vmem:[#allocation2 + $0x8a] sm:$0x3] %vm265, 0.0
          %292 = vst.msk [vmem:[#allocation2 + $0xa2] sm:$0x3] %vm265, 0.0
          %293 = vst.msk [vmem:[#allocation2 + $0xba] sm:$0x3] %vm265, 0.0
          %294 = vst.msk [vmem:[#allocation2 + $0xd2] sm:$0x3] %vm265, 0.0
          %295 = vst.msk [vmem:[#allocation2 + $0xea] sm:$0x3] %vm265, 0.0
          %296 = vst.msk [vmem:[#allocation2 + $0x102] sm:$0x3] %vm265, 0.0
          %297 = vst.msk [vmem:[#allocation2 + $0x11a] sm:$0x3] %vm265, 0.0
          %298 = vst.msk [vmem:[#allocation2 + $0x132] sm:$0x3] %vm265, 0.0
          %299 = vst.msk [vmem:[#allocation2 + $0x14a] sm:$0x3] %vm265, 0.0
          %300 = vst.msk [vmem:[#allocation2 + $0x162] sm:$0x3] %vm265, 0.0
          %301 = vst.msk [vmem:[#allocation2 + $0x17a] sm:$0x3] %vm265, 0.0
          %302 = vst.msk [vmem:[#allocation2 + $0x192] sm:$0x3] %vm265, 0.0
          %303 = vst.msk [vmem:[#allocation2 + $0x1aa] sm:$0x3] %vm265, 0.0
          %304 = vst.msk [vmem:[#allocation2 + $0x1c2] sm:$0x3] %vm265, 0.0
          %305 = vst.msk [vmem:[#allocation2 + $0x1da] sm:$0x3] %vm265, 0.0
          %v306 = vld [vmem:[%s234] sm:$0xff]
          %v307 = vld [vmem:[%s234 + $0x8] sm:$0xff]
          %v308 = vld [vmem:[%s234 + $0x10] sm:$0xff]
          %v309 = vld [vmem:[%s234 + $0x18] sm:$0xff]
          %v310 = vld [vmem:[%s234 + $0x20] sm:$0xff]
          %v311 = vld [vmem:[%s234 + $0x28] sm:$0xff]
          %v312 = vld [vmem:[%s234 + $0x30] sm:$0xff]
          %v313 = vld [vmem:[%s234 + $0x38] sm:$0xff]
          %v314 = vld [vmem:[%s234 + $0x40] sm:$0xff]
          %v315 = vld [vmem:[%s234 + $0x48] sm:$0xff]
          %v316 = vld [vmem:[%s234 + $0x50] sm:$0xff]
          %v317 = vld [vmem:[%s234 + $0x58] sm:$0xff]
          %v318 = vld [vmem:[%s234 + $0x60] sm:$0xff]
          %v319 = vld [vmem:[%s234 + $0x68] sm:$0xff]
          %v320 = vld [vmem:[%s234 + $0x70] sm:$0xff]
          %v321 = vld [vmem:[%s234 + $0x78] sm:$0xff]
          %v322 = vld [vmem:[%s234 + $0x80] sm:$0xff]
          %v323 = vld [vmem:[%s234 + $0x88] sm:$0xff]
          %v324 = vld [vmem:[%s234 + $0x90] sm:$0xff]
          %v325 = vld [vmem:[%s234 + $0x98] sm:$0xff]
          %v326 = vld [vmem:[%s234 + $0xa0] sm:$0xff]
          %v327 = vld [vmem:[%s234 + $0xa8] sm:$0xff]
          %v328 = vld [vmem:[%s234 + $0xb0] sm:$0xff]
          %v329 = vld [vmem:[%s234 + $0xb8] sm:$0xff]
          %v330 = vld [vmem:[%s234 + $0xc0] sm:$0xff]
          %v331 = vld [vmem:[%s234 + $0xc8] sm:$0xff]
          %v332 = vld [vmem:[%s234 + $0xd0] sm:$0xff]
          %v333 = vld [vmem:[%s234 + $0xd8] sm:$0xff]
          %v334 = vld [vmem:[%s234 + $0xe0] sm:$0xff]
          %v335 = vld [vmem:[%s234 + $0xe8] sm:$0xff]
          %v336 = vld [vmem:[%s234 + $0xf0] sm:$0xff]
          %v337 = vld [vmem:[%s234 + $0xf8] sm:$0xff]
          %s338 = scalar_lea.vmem [#allocation2], 48
          %339 = vst.msk [vmem:[%s338 + $0x2] sm:$0xff] %vm250, %v306
          %340 = vst.msk [vmem:[%s338 + $0xa] sm:$0xff] %vm250, %v307
          %341 = vst.msk [vmem:[%s338 + $0x1a] sm:$0xff] %vm250, %v308
          %342 = vst.msk [vmem:[%s338 + $0x22] sm:$0xff] %vm250, %v309
          %343 = vst.msk [vmem:[%s338 + $0x32] sm:$0xff] %vm250, %v310
          %344 = vst.msk [vmem:[%s338 + $0x3a] sm:$0xff] %vm250, %v311
          %345 = vst.msk [vmem:[%s338 + $0x4a] sm:$0xff] %vm250, %v312
          %346 = vst.msk [vmem:[%s338 + $0x52] sm:$0xff] %vm250, %v313
          %347 = vst.msk [vmem:[%s338 + $0x62] sm:$0xff] %vm250, %v314
          %348 = vst.msk [vmem:[%s338 + $0x6a] sm:$0xff] %vm250, %v315
          %349 = vst.msk [vmem:[%s338 + $0x7a] sm:$0xff] %vm250, %v316
          %350 = vst.msk [vmem:[%s338 + $0x82] sm:$0xff] %vm250, %v317
          %351 = vst.msk [vmem:[%s338 + $0x92] sm:$0xff] %vm250, %v318
          %352 = vst.msk [vmem:[%s338 + $0x9a] sm:$0xff] %vm250, %v319
          %353 = vst.msk [vmem:[%s338 + $0xaa] sm:$0xff] %vm250, %v320
          %354 = vst.msk [vmem:[%s338 + $0xb2] sm:$0xff] %vm250, %v321
          %355 = vst.msk [vmem:[%s338 + $0xc2] sm:$0xff] %vm250, %v322
          %356 = vst.msk [vmem:[%s338 + $0xca] sm:$0xff] %vm250, %v323
          %357 = vst.msk [vmem:[%s338 + $0xda] sm:$0xff] %vm250, %v324
          %358 = vst.msk [vmem:[%s338 + $0xe2] sm:$0xff] %vm250, %v325
          %359 = vst.msk [vmem:[%s338 + $0xf2] sm:$0xff] %vm250, %v326
          %360 = vst.msk [vmem:[%s338 + $0xfa] sm:$0xff] %vm250, %v327
          %361 = vst.msk [vmem:[%s338 + $0x10a] sm:$0xff] %vm250, %v328
          %362 = vst.msk [vmem:[%s338 + $0x112] sm:$0xff] %vm250, %v329
          %363 = vst.msk [vmem:[%s338 + $0x122] sm:$0xff] %vm250, %v330
          %364 = vst.msk [vmem:[%s338 + $0x12a] sm:$0xff] %vm250, %v331
          %365 = vst.msk [vmem:[%s338 + $0x13a] sm:$0xff] %vm250, %v332
          %366 = vst.msk [vmem:[%s338 + $0x142] sm:$0xff] %vm250, %v333
          %367 = vst.msk [vmem:[%s338 + $0x152] sm:$0xff] %vm250, %v334
          %368 = vst.msk [vmem:[%s338 + $0x15a] sm:$0xff] %vm250, %v335
          %369 = vst.msk [vmem:[%s338 + $0x16a] sm:$0xff] %vm250, %v336
          %370 = vst.msk [vmem:[%s338 + $0x172] sm:$0xff] %vm250, %v337
        $region32: #{tpu_custom_call.1} parent=27 // pred_fallthru
          _
        %s371 = smul.u32 %s27, 8
        %v372 = vld [vmem:[%s1] sm:$0xf]
        %v373 = vld [vmem:[%s1 + $0x4] sm:$0xf]
        %v374 = vld [vmem:[%s1 + $0x8] sm:$0xf]
        %v375 = vld [vmem:[%s1 + $0xc] sm:$0xf]
        %v376 = vld [vmem:[%s1 + $0x10] sm:$0xf]
        %v377 = vld [vmem:[%s1 + $0x14] sm:$0xf]
        %v378 = vld [vmem:[%s1 + $0x18] sm:$0xf]
        %v379 = vld [vmem:[%s1 + $0x1c] sm:$0xf]
        %v380 = vld [vmem:[%s1 + $0x20] sm:$0xf]
        %s381 = smul.u32 %s371, 24
        %s382 = scalar_lea.vmem [#allocation2], %s381
        %v383 = vld [vmem:[%s382] sm:$0xff]
        %v384 = vld [vmem:[%s382 + $0x8] sm:$0xff]
        %v385 = vld [vmem:[%s382 + $0x18] sm:$0xff]
        %v386 = vld [vmem:[%s382 + $0x20] sm:$0xff]
        %v387 = vld [vmem:[%s382 + $0x30] sm:$0xff]
        %v388 = vld [vmem:[%s382 + $0x38] sm:$0xff]
        %v389 = vld [vmem:[%s382 + $0x48] sm:$0xff]
        %v390 = vld [vmem:[%s382 + $0x50] sm:$0xff]
        %v391 = vld [vmem:[%s382 + $0x60] sm:$0xff]
        %v392 = vld [vmem:[%s382 + $0x68] sm:$0xff]
        %v393 = vld [vmem:[%s382 + $0x78] sm:$0xff]
        %v394 = vld [vmem:[%s382 + $0x80] sm:$0xff]
        %v395 = vld [vmem:[%s382 + $0x90] sm:$0xff]
        %v396 = vld [vmem:[%s382 + $0x98] sm:$0xff]
        %v397 = vld [vmem:[%s382 + $0xa8] sm:$0xff]
        %v398 = vld [vmem:[%s382 + $0xb0] sm:$0xff]
        %v399 = vld [vmem:[%s382 + $0x2] sm:$0xff]
        %v400 = vld [vmem:[%s382 + $0xa] sm:$0xff]
        %v401 = vld [vmem:[%s382 + $0x1a] sm:$0xff]
        %v402 = vld [vmem:[%s382 + $0x22] sm:$0xff]
        %v403 = vld [vmem:[%s382 + $0x32] sm:$0xff]
        %v404 = vld [vmem:[%s382 + $0x3a] sm:$0xff]
        %v405 = vld [vmem:[%s382 + $0x4a] sm:$0xff]
        %v406 = vld [vmem:[%s382 + $0x52] sm:$0xff]
        %v407 = vld [vmem:[%s382 + $0x62] sm:$0xff]
        %v408 = vld [vmem:[%s382 + $0x6a] sm:$0xff]
        %v409 = vld [vmem:[%s382 + $0x7a] sm:$0xff]
        %v410 = vld [vmem:[%s382 + $0x82] sm:$0xff]
        %v411 = vld [vmem:[%s382 + $0x92] sm:$0xff]
        %v412 = vld [vmem:[%s382 + $0x9a] sm:$0xff]
        %v413 = vld [vmem:[%s382 + $0xaa] sm:$0xff]
        %v414 = vld [vmem:[%s382 + $0xb2] sm:$0xff]
        %vm415 = vcmask 31744
        %v417 = vsel %vm415, %v399, 0
        %v420 = vsel %vm415, %v400, 0
        %v423 = vsel %vm415, %v401, 0
        %v426 = vsel %vm415, %v402, 0
        %v429 = vsel %vm415, %v403, 0
        %v432 = vsel %vm415, %v404, 0
        %v435 = vsel %vm415, %v405, 0
        %v438 = vsel %vm415, %v406, 0
        %v441 = vsel %vm415, %v407, 0
        %v444 = vsel %vm415, %v408, 0
        %v447 = vsel %vm415, %v409, 0
        %v450 = vsel %vm415, %v410, 0
        %v453 = vsel %vm415, %v411, 0
        %v456 = vsel %vm415, %v412, 0
        %v459 = vsel %vm415, %v413, 0
        %v462 = vsel %vm415, %v414, 0
        %vm464 = vcmask 1043456
        %v466 = vsel %vm464, %v373, 0
        %468 = vmatprep.subr.mxu0 0.0
        %469 = vmatpush1.msra.mxu0 %v466
        %470 = vmatprep.subr.mxu0 0.0
        %471 = vmatpush1.msra.mxu0 0.0
        %472 = vmatprep.subr.mxu0 0.0
        %473 = vmatpush1.msra.mxu0 0.0
        %474 = vmatprep.subr.mxu0 0.0
        %475 = vmatpush1.msra.mxu0 0.0
        %476 = vmatprep.subr.mxu0 0.0
        %477 = vmatpush1.msra.mxu0 0.0
        %478 = vmatprep.subr.mxu0 0.0
        %479 = vmatpush1.msra.mxu0 0.0
        %480 = vmatprep.subr.mxu0 0.0
        %481 = vmatpush1.msra.mxu0 0.0
        %482 = vmatprep.subr.mxu0 0.0
        %483 = vmatpush1.msra.mxu0 0.0
        %484 = vmatprep.subr.mxu0 0.0
        %485 = vmatpush1.msra.mxu0 0.0
        %486 = vmatprep.subr.mxu0 0.0
        %487 = vmatpush1.msra.mxu0 0.0
        %488 = vmatprep.subr.mxu0 0.0
        %489 = vmatpush1.msra.mxu0 0.0
        %490 = vmatprep.subr.mxu0 0.0
        %491 = vmatpush1.msra.mxu0 0.0
        %492 = vmatprep.subr.mxu0 0.0
        %493 = vmatpush1.msra.mxu0 0.0
        %494 = vmatprep.subr.mxu0 0.0
        %495 = vmatpush1.msra.mxu0 0.0
        %496 = vmatprep.subr.mxu0 0.0
        %497 = vmatpush1.msra.mxu0 0.0
        %498 = vmatprep.subr.mxu0 0.0
        %499 = vmatpush1.msra.mxu0 0.0
        %500 = vmatprep.subr.mxu0 0.0
        %501 = vmatpush1.msra.mxu0 0.0
        %502 = vmatprep.subr.mxu0 0.0
        %503 = vmatpush1.msra.mxu0 0.0
        %504 = vmatprep.subr.mxu0 0.0
        %505 = vmatpush1.msra.mxu0 0.0
        %506 = vmatprep.subr.mxu0 0.0
        %507 = vmatpush1.msra.mxu0 0.0
        %508 = vmatprep.subr.mxu0 0.0
        %509 = vmatpush1.msra.mxu0 0.0
        %510 = vmatprep.subr.mxu0 0.0
        %511 = vmatpush1.msra.mxu0 0.0
        %512 = vmatprep.subr.mxu0 0.0
        %513 = vmatpush1.msra.mxu0 0.0
        %514 = vmatprep.subr.mxu0 0.0
        %515 = vmatpush1.msra.mxu0 0.0
        %516 = vmatprep.subr.mxu0 0.0
        %517 = vmatpush1.msra.mxu0 0.0
        %518 = vmatprep.subr.mxu0 0.0
        %519 = vmatpush1.msra.mxu0 0.0
        %520 = vmatprep.subr.mxu0 0.0
        %521 = vmatpush1.msra.mxu0 0.0
        %522 = vmatprep.subr.mxu0 0.0
        %523 = vmatpush1.msra.mxu0 0.0
        %524 = vmatprep.subr.mxu0 0.0
        %525 = vmatpush1.msra.mxu0 0.0
        %526 = vmatprep.subr.mxu0 0.0
        %527 = vmatpush1.msra.mxu0 0.0
        %528 = vmatprep.subr.mxu0 0.0
        %529 = vmatpush1.msra.mxu0 0.0
        %530 = vmatprep.subr.mxu0 0.0
        %531 = vmatpush1.msra.mxu0 0.0
        %532 = vmatprep.mubr.f32.mxu0 0.0
        %533 = vmatmul.mubr.f32.gmra.mrb[0].mxu0 %v417
        %v534 = vpop.f32.mrb[0].mxu0
        %v535 = vadd.f32 0.0, %v534
        %v536 = vpop.f32.mrb[0].mxu0
        %537 = vmatprep.mubr.f32.mxu0 0.0
        %538 = vmatmul.mubr.f32.gmra.mrb[0].mxu0 %v420
        %v539 = vpop.f32.mrb[0].mxu0
        %v540 = vadd.f32 0.0, %v539
        %v541 = vpop.f32.mrb[0].mxu0
        %542 = vmatprep.mubr.f32.mxu0 0.0
        %543 = vmatmul.mubr.f32.gmra.mrb[0].mxu0 %v423
        %v544 = vpop.f32.mrb[0].mxu0
        %v545 = vadd.f32 0.0, %v544
        %v546 = vpop.f32.mrb[0].mxu0
        %547 = vmatprep.mubr.f32.mxu0 0.0
        %548 = vmatmul.mubr.f32.gmra.mrb[0].mxu0 %v426
        %v549 = vpop.f32.mrb[0].mxu0
        %v550 = vadd.f32 0.0, %v549
        %v551 = vpop.f32.mrb[0].mxu0
        %552 = vmatprep.mubr.f32.mxu0 0.0
        %553 = vmatmul.mubr.f32.gmra.mrb[0].mxu0 %v429
        %v554 = vpop.f32.mrb[0].mxu0
        %v555 = vadd.f32 0.0, %v554
        %v556 = vpop.f32.mrb[0].mxu0
        %557 = vmatprep.mubr.f32.mxu0 0.0
        %558 = vmatmul.mubr.f32.gmra.mrb[0].mxu0 %v432
        %v559 = vpop.f32.mrb[0].mxu0
        %v560 = vadd.f32 0.0, %v559
        %v561 = vpop.f32.mrb[0].mxu0
        %562 = vmatprep.mubr.f32.mxu0 0.0
        %563 = vmatmul.mubr.f32.gmra.mrb[0].mxu0 %v435
        %v564 = vpop.f32.mrb[0].mxu0
        %v565 = vadd.f32 0.0, %v564
        %v566 = vpop.f32.mrb[0].mxu0
        %567 = vmatprep.mubr.f32.mxu0 0.0
        %568 = vmatmul.mubr.f32.gmra.mrb[0].mxu0 %v438
        %v569 = vpop.f32.mrb[0].mxu0
        %v570 = vadd.f32 0.0, %v569
        %v571 = vpop.f32.mrb[0].mxu0
        %572 = vmatprep.mubr.f32.mxu0 0.0
        %573 = vmatmul.mubr.f32.gmra.mrb[0].mxu0 %v441
        %v574 = vpop.f32.mrb[0].mxu0
        %v575 = vadd.f32 0.0, %v574
        %v576 = vpop.f32.mrb[0].mxu0
        %577 = vmatprep.mubr.f32.mxu0 0.0
        %578 = vmatmul.mubr.f32.gmra.mrb[0].mxu0 %v444
        %v579 = vpop.f32.mrb[0].mxu0
        %v580 = vadd.f32 0.0, %v579
        %v581 = vpop.f32.mrb[0].mxu0
        %582 = vmatprep.mubr.f32.mxu0 0.0
        %583 = vmatmul.mubr.f32.gmra.mrb[0].mxu0 %v447
        %v584 = vpop.f32.mrb[0].mxu0
        %v585 = vadd.f32 0.0, %v584
        %v586 = vpop.f32.mrb[0].mxu0
        %587 = vmatprep.mubr.f32.mxu0 0.0
        %588 = vmatmul.mubr.f32.gmra.mrb[0].mxu0 %v450
        %v589 = vpop.f32.mrb[0].mxu0
        %v590 = vadd.f32 0.0, %v589
        %v591 = vpop.f32.mrb[0].mxu0
        %592 = vmatprep.mubr.f32.mxu0 0.0
        %593 = vmatmul.mubr.f32.gmra.mrb[0].mxu0 %v453
        %v594 = vpop.f32.mrb[0].mxu0
        %v595 = vadd.f32 0.0, %v594
        %v596 = vpop.f32.mrb[0].mxu0
        %597 = vmatprep.mubr.f32.mxu0 0.0
        %598 = vmatmul.mubr.f32.gmra.mrb[0].mxu0 %v456
        %v599 = vpop.f32.mrb[0].mxu0
        %v600 = vadd.f32 0.0, %v599
        %v601 = vpop.f32.mrb[0].mxu0
        %602 = vmatprep.mubr.f32.mxu0 0.0
        %603 = vmatmul.mubr.f32.gmra.mrb[0].mxu0 %v459
        %v604 = vpop.f32.mrb[0].mxu0
        %v605 = vadd.f32 0.0, %v604
        %v606 = vpop.f32.mrb[0].mxu0
        %607 = vmatprep.mubr.f32.mxu0 0.0
        %608 = vmatmul.mubr.f32.gmra.mrb[0].mxu0 %v462
        %v609 = vpop.f32.mrb[0].mxu0
        %v610 = vadd.f32 0.0, %v609
        %v611 = vpop.f32.mrb[0].mxu0
        %612 = vdwg.mxu0
        %v614 = vsel %vm415, %v383, 0
        %v617 = vsel %vm415, %v384, 0
        %v620 = vsel %vm415, %v385, 0
        %v623 = vsel %vm415, %v386, 0
        %v626 = vsel %vm415, %v387, 0
        %v629 = vsel %vm415, %v388, 0
        %v632 = vsel %vm415, %v389, 0
        %v635 = vsel %vm415, %v390, 0
        %v638 = vsel %vm415, %v391, 0
        %v641 = vsel %vm415, %v392, 0
        %v644 = vsel %vm415, %v393, 0
        %v647 = vsel %vm415, %v394, 0
        %v650 = vsel %vm415, %v395, 0
        %v653 = vsel %vm415, %v396, 0
        %v656 = vsel %vm415, %v397, 0
        %v659 = vsel %vm415, %v398, 0
        %v662 = vsel %vm464, %v372, 0
        %664 = vmatprep.subr.mxu0 0.0
        %665 = vmatpush1.msra.mxu0 %v662
        %666 = vmatprep.subr.mxu0 0.0
        %667 = vmatpush1.msra.mxu0 0.0
        %668 = vmatprep.subr.mxu0 0.0
        %669 = vmatpush1.msra.mxu0 0.0
        %670 = vmatprep.subr.mxu0 0.0
        %671 = vmatpush1.msra.mxu0 0.0
        %672 = vmatprep.subr.mxu0 0.0
        %673 = vmatpush1.msra.mxu0 0.0
        %674 = vmatprep.subr.mxu0 0.0
        %675 = vmatpush1.msra.mxu0 0.0
        %676 = vmatprep.subr.mxu0 0.0
        %677 = vmatpush1.msra.mxu0 0.0
        %678 = vmatprep.subr.mxu0 0.0
        %679 = vmatpush1.msra.mxu0 0.0
        %680 = vmatprep.subr.mxu0 0.0
        %681 = vmatpush1.msra.mxu0 0.0
        %682 = vmatprep.subr.mxu0 0.0
        %683 = vmatpush1.msra.mxu0 0.0
        %684 = vmatprep.subr.mxu0 0.0
        %685 = vmatpush1.msra.mxu0 0.0
        %686 = vmatprep.subr.mxu0 0.0
        %687 = vmatpush1.msra.mxu0 0.0
        %688 = vmatprep.subr.mxu0 0.0
        %689 = vmatpush1.msra.mxu0 0.0
        %690 = vmatprep.subr.mxu0 0.0
        %691 = vmatpush1.msra.mxu0 0.0
        %692 = vmatprep.subr.mxu0 0.0
        %693 = vmatpush1.msra.mxu0 0.0
        %694 = vmatprep.subr.mxu0 0.0
        %695 = vmatpush1.msra.mxu0 0.0
        %696 = vmatprep.subr.mxu0 0.0
        %697 = vmatpush1.msra.mxu0 0.0
        %698 = vmatprep.subr.mxu0 0.0
        %699 = vmatpush1.msra.mxu0 0.0
        %700 = vmatprep.subr.mxu0 0.0
        %701 = vmatpush1.msra.mxu0 0.0
        %702 = vmatprep.subr.mxu0 0.0
        %703 = vmatpush1.msra.mxu0 0.0
        %704 = vmatprep.subr.mxu0 0.0
        %705 = vmatpush1.msra.mxu0 0.0
        %706 = vmatprep.subr.mxu0 0.0
        %707 = vmatpush1.msra.mxu0 0.0
        %708 = vmatprep.subr.mxu0 0.0
        %709 = vmatpush1.msra.mxu0 0.0
        %710 = vmatprep.subr.mxu0 0.0
        %711 = vmatpush1.msra.mxu0 0.0
        %712 = vmatprep.subr.mxu0 0.0
        %713 = vmatpush1.msra.mxu0 0.0
        %714 = vmatprep.subr.mxu0 0.0
        %715 = vmatpush1.msra.mxu0 0.0
        %716 = vmatprep.subr.mxu0 0.0
        %717 = vmatpush1.msra.mxu0 0.0
        %718 = vmatprep.subr.mxu0 0.0
        %719 = vmatpush1.msra.mxu0 0.0
        %720 = vmatprep.subr.mxu0 0.0
        %721 = vmatpush1.msra.mxu0 0.0
        %722 = vmatprep.subr.mxu0 0.0
        %723 = vmatpush1.msra.mxu0 0.0
        %724 = vmatprep.subr.mxu0 0.0
        %725 = vmatpush1.msra.mxu0 0.0
        %726 = vmatprep.subr.mxu0 0.0
        %727 = vmatpush1.msra.mxu0 0.0
        %728 = vmatprep.mubr.f32.mxu0 0.0
        %729 = vmatmul.mubr.f32.gmra.mrb[0].mxu0 %v614
        %v730 = vpop.f32.mrb[0].mxu0
        %v731 = vadd.f32 %v535, %v730
        %v732 = vpop.f32.mrb[0].mxu0
        %733 = vmatprep.mubr.f32.mxu0 0.0
        %734 = vmatmul.mubr.f32.gmra.mrb[0].mxu0 %v617
        %v735 = vpop.f32.mrb[0].mxu0
        %v736 = vadd.f32 %v540, %v735
        %v737 = vpop.f32.mrb[0].mxu0
        %738 = vmatprep.mubr.f32.mxu0 0.0
        %739 = vmatmul.mubr.f32.gmra.mrb[0].mxu0 %v620
        %v740 = vpop.f32.mrb[0].mxu0
        %v741 = vadd.f32 %v545, %v740
        %v742 = vpop.f32.mrb[0].mxu0
        %743 = vmatprep.mubr.f32.mxu0 0.0
        %744 = vmatmul.mubr.f32.gmra.mrb[0].mxu0 %v623
        %v745 = vpop.f32.mrb[0].mxu0
        %v746 = vadd.f32 %v550, %v745
        %v747 = vpop.f32.mrb[0].mxu0
        %748 = vmatprep.mubr.f32.mxu0 0.0
        %749 = vmatmul.mubr.f32.gmra.mrb[0].mxu0 %v626
        %v750 = vpop.f32.mrb[0].mxu0
        %v751 = vadd.f32 %v555, %v750
        %v752 = vpop.f32.mrb[0].mxu0
        %753 = vmatprep.mubr.f32.mxu0 0.0
        %754 = vmatmul.mubr.f32.gmra.mrb[0].mxu0 %v629
        %v755 = vpop.f32.mrb[0].mxu0
        %v756 = vadd.f32 %v560, %v755
        %v757 = vpop.f32.mrb[0].mxu0
        %758 = vmatprep.mubr.f32.mxu0 0.0
        %759 = vmatmul.mubr.f32.gmra.mrb[0].mxu0 %v632
        %v760 = vpop.f32.mrb[0].mxu0
        %v761 = vadd.f32 %v565, %v760
        %v762 = vpop.f32.mrb[0].mxu0
        %763 = vmatprep.mubr.f32.mxu0 0.0
        %764 = vmatmul.mubr.f32.gmra.mrb[0].mxu0 %v635
        %v765 = vpop.f32.mrb[0].mxu0
        %v766 = vadd.f32 %v570, %v765
        %v767 = vpop.f32.mrb[0].mxu0
        %768 = vmatprep.mubr.f32.mxu0 0.0
        %769 = vmatmul.mubr.f32.gmra.mrb[0].mxu0 %v638
        %v770 = vpop.f32.mrb[0].mxu0
        %v771 = vadd.f32 %v575, %v770
        %v772 = vpop.f32.mrb[0].mxu0
        %773 = vmatprep.mubr.f32.mxu0 0.0
        %774 = vmatmul.mubr.f32.gmra.mrb[0].mxu0 %v641
        %v775 = vpop.f32.mrb[0].mxu0
        %v776 = vadd.f32 %v580, %v775
        %v777 = vpop.f32.mrb[0].mxu0
        %778 = vmatprep.mubr.f32.mxu0 0.0
        %779 = vmatmul.mubr.f32.gmra.mrb[0].mxu0 %v644
        %v780 = vpop.f32.mrb[0].mxu0
        %v781 = vadd.f32 %v585, %v780
        %v782 = vpop.f32.mrb[0].mxu0
        %783 = vmatprep.mubr.f32.mxu0 0.0
        %784 = vmatmul.mubr.f32.gmra.mrb[0].mxu0 %v647
        %v785 = vpop.f32.mrb[0].mxu0
        %v786 = vadd.f32 %v590, %v785
        %v787 = vpop.f32.mrb[0].mxu0
        %788 = vmatprep.mubr.f32.mxu0 0.0
        %789 = vmatmul.mubr.f32.gmra.mrb[0].mxu0 %v650
        %v790 = vpop.f32.mrb[0].mxu0
        %v791 = vadd.f32 %v595, %v790
        %v792 = vpop.f32.mrb[0].mxu0
        %793 = vmatprep.mubr.f32.mxu0 0.0
        %794 = vmatmul.mubr.f32.gmra.mrb[0].mxu0 %v653
        %v795 = vpop.f32.mrb[0].mxu0
        %v796 = vadd.f32 %v600, %v795
        %v797 = vpop.f32.mrb[0].mxu0
        %798 = vmatprep.mubr.f32.mxu0 0.0
        %799 = vmatmul.mubr.f32.gmra.mrb[0].mxu0 %v656
        %v800 = vpop.f32.mrb[0].mxu0
        %v801 = vadd.f32 %v605, %v800
        %v802 = vpop.f32.mrb[0].mxu0
        %803 = vmatprep.mubr.f32.mxu0 0.0
        %804 = vmatmul.mubr.f32.gmra.mrb[0].mxu0 %v659
        %v805 = vpop.f32.mrb[0].mxu0
        %v806 = vadd.f32 %v610, %v805
        %v807 = vpop.f32.mrb[0].mxu0
        %808 = vdwg.mxu0
        %v809 = vld [vmem:[%s382 + $0x4] sm:$0xff]
        %v810 = vld [vmem:[%s382 + $0xc] sm:$0xff]
        %v811 = vld [vmem:[%s382 + $0x1c] sm:$0xff]
        %v812 = vld [vmem:[%s382 + $0x24] sm:$0xff]
        %v813 = vld [vmem:[%s382 + $0x34] sm:$0xff]
        %v814 = vld [vmem:[%s382 + $0x3c] sm:$0xff]
        %v815 = vld [vmem:[%s382 + $0x4c] sm:$0xff]
        %v816 = vld [vmem:[%s382 + $0x54] sm:$0xff]
        %v817 = vld [vmem:[%s382 + $0x64] sm:$0xff]
        %v818 = vld [vmem:[%s382 + $0x6c] sm:$0xff]
        %v819 = vld [vmem:[%s382 + $0x7c] sm:$0xff]
        %v820 = vld [vmem:[%s382 + $0x84] sm:$0xff]
        %v821 = vld [vmem:[%s382 + $0x94] sm:$0xff]
        %v822 = vld [vmem:[%s382 + $0x9c] sm:$0xff]
        %v823 = vld [vmem:[%s382 + $0xac] sm:$0xff]
        %v824 = vld [vmem:[%s382 + $0xb4] sm:$0xff]
        %v826 = vsel %vm415, %v809, 0
        %v829 = vsel %vm415, %v810, 0
        %v832 = vsel %vm415, %v811, 0
        %v835 = vsel %vm415, %v812, 0
        %v838 = vsel %vm415, %v813, 0
        %v841 = vsel %vm415, %v814, 0
        %v844 = vsel %vm415, %v815, 0
        %v847 = vsel %vm415, %v816, 0
        %v850 = vsel %vm415, %v817, 0
        %v853 = vsel %vm415, %v818, 0
        %v856 = vsel %vm415, %v819, 0
        %v859 = vsel %vm415, %v820, 0
        %v862 = vsel %vm415, %v821, 0
        %v865 = vsel %vm415, %v822, 0
        %v868 = vsel %vm415, %v823, 0
        %v871 = vsel %vm415, %v824, 0
        %v874 = vsel %vm464, %v374, 0
        %876 = vmatprep.subr.mxu0 0.0
        %877 = vmatpush1.msra.mxu0 %v874
        %878 = vmatprep.subr.mxu0 0.0
        %879 = vmatpush1.msra.mxu0 0.0
        %880 = vmatprep.subr.mxu0 0.0
        %881 = vmatpush1.msra.mxu0 0.0
        %882 = vmatprep.subr.mxu0 0.0
        %883 = vmatpush1.msra.mxu0 0.0
        %884 = vmatprep.subr.mxu0 0.0
        %885 = vmatpush1.msra.mxu0 0.0
        %886 = vmatprep.subr.mxu0 0.0
        %887 = vmatpush1.msra.mxu0 0.0
        %888 = vmatprep.subr.mxu0 0.0
        %889 = vmatpush1.msra.mxu0 0.0
        %890 = vmatprep.subr.mxu0 0.0
        %891 = vmatpush1.msra.mxu0 0.0
        %892 = vmatprep.subr.mxu0 0.0
        %893 = vmatpush1.msra.mxu0 0.0
        %894 = vmatprep.subr.mxu0 0.0
        %895 = vmatpush1.msra.mxu0 0.0
        %896 = vmatprep.subr.mxu0 0.0
        %897 = vmatpush1.msra.mxu0 0.0
        %898 = vmatprep.subr.mxu0 0.0
        %899 = vmatpush1.msra.mxu0 0.0
        %900 = vmatprep.subr.mxu0 0.0
        %901 = vmatpush1.msra.mxu0 0.0
        %902 = vmatprep.subr.mxu0 0.0
        %903 = vmatpush1.msra.mxu0 0.0
        %904 = vmatprep.subr.mxu0 0.0
        %905 = vmatpush1.msra.mxu0 0.0
        %906 = vmatprep.subr.mxu0 0.0
        %907 = vmatpush1.msra.mxu0 0.0
        %908 = vmatprep.subr.mxu0 0.0
        %909 = vmatpush1.msra.mxu0 0.0
        %910 = vmatprep.subr.mxu0 0.0
        %911 = vmatpush1.msra.mxu0 0.0
        %912 = vmatprep.subr.mxu0 0.0
        %913 = vmatpush1.msra.mxu0 0.0
        %914 = vmatprep.subr.mxu0 0.0
        %915 = vmatpush1.msra.mxu0 0.0
        %916 = vmatprep.subr.mxu0 0.0
        %917 = vmatpush1.msra.mxu0 0.0
        %918 = vmatprep.subr.mxu0 0.0
        %919 = vmatpush1.msra.mxu0 0.0
        %920 = vmatprep.subr.mxu0 0.0
        %921 = vmatpush1.msra.mxu0 0.0
        %922 = vmatprep.subr.mxu0 0.0
        %923 = vmatpush1.msra.mxu0 0.0
        %924 = vmatprep.subr.mxu0 0.0
        %925 = vmatpush1.msra.mxu0 0.0
        %926 = vmatprep.subr.mxu0 0.0
        %927 = vmatpush1.msra.mxu0 0.0
        %928 = vmatprep.subr.mxu0 0.0
        %929 = vmatpush1.msra.mxu0 0.0
        %930 = vmatprep.subr.mxu0 0.0
        %931 = vmatpush1.msra.mxu0 0.0
        %932 = vmatprep.subr.mxu0 0.0
        %933 = vmatpush1.msra.mxu0 0.0
        %934 = vmatprep.subr.mxu0 0.0
        %935 = vmatpush1.msra.mxu0 0.0
        %936 = vmatprep.subr.mxu0 0.0
        %937 = vmatpush1.msra.mxu0 0.0
        %938 = vmatprep.subr.mxu0 0.0
        %939 = vmatpush1.msra.mxu0 0.0
        %940 = vmatprep.mubr.f32.mxu0 0.0
        %941 = vmatmul.mubr.f32.gmra.mrb[0].mxu0 %v826
        %v942 = vpop.f32.mrb[0].mxu0
        %v943 = vadd.f32 0.0, %v942
        %v944 = vpop.f32.mrb[0].mxu0
        %945 = vmatprep.mubr.f32.mxu0 0.0
        %946 = vmatmul.mubr.f32.gmra.mrb[0].mxu0 %v829
        %v947 = vpop.f32.mrb[0].mxu0
        %v948 = vadd.f32 0.0, %v947
        %v949 = vpop.f32.mrb[0].mxu0
        %950 = vmatprep.mubr.f32.mxu0 0.0
        %951 = vmatmul.mubr.f32.gmra.mrb[0].mxu0 %v832
        %v952 = vpop.f32.mrb[0].mxu0
        %v953 = vadd.f32 0.0, %v952
        %v954 = vpop.f32.mrb[0].mxu0
        %955 = vmatprep.mubr.f32.mxu0 0.0
        %956 = vmatmul.mubr.f32.gmra.mrb[0].mxu0 %v835
        %v957 = vpop.f32.mrb[0].mxu0
        %v958 = vadd.f32 0.0, %v957
        %v959 = vpop.f32.mrb[0].mxu0
        %960 = vmatprep.mubr.f32.mxu0 0.0
        %961 = vmatmul.mubr.f32.gmra.mrb[0].mxu0 %v838
        %v962 = vpop.f32.mrb[0].mxu0
        %v963 = vadd.f32 0.0, %v962
        %v964 = vpop.f32.mrb[0].mxu0
        %965 = vmatprep.mubr.f32.mxu0 0.0
        %966 = vmatmul.mubr.f32.gmra.mrb[0].mxu0 %v841
        %v967 = vpop.f32.mrb[0].mxu0
        %v968 = vadd.f32 0.0, %v967
        %v969 = vpop.f32.mrb[0].mxu0
        %970 = vmatprep.mubr.f32.mxu0 0.0
        %971 = vmatmul.mubr.f32.gmra.mrb[0].mxu0 %v844
        %v972 = vpop.f32.mrb[0].mxu0
        %v973 = vadd.f32 0.0, %v972
        %v974 = vpop.f32.mrb[0].mxu0
        %975 = vmatprep.mubr.f32.mxu0 0.0
        %976 = vmatmul.mubr.f32.gmra.mrb[0].mxu0 %v847
        %v977 = vpop.f32.mrb[0].mxu0
        %v978 = vadd.f32 0.0, %v977
        %v979 = vpop.f32.mrb[0].mxu0
        %980 = vmatprep.mubr.f32.mxu0 0.0
        %981 = vmatmul.mubr.f32.gmra.mrb[0].mxu0 %v850
        %v982 = vpop.f32.mrb[0].mxu0
        %v983 = vadd.f32 0.0, %v982
        %v984 = vpop.f32.mrb[0].mxu0
        %985 = vmatprep.mubr.f32.mxu0 0.0
        %986 = vmatmul.mubr.f32.gmra.mrb[0].mxu0 %v853
        %v987 = vpop.f32.mrb[0].mxu0
        %v988 = vadd.f32 0.0, %v987
        %v989 = vpop.f32.mrb[0].mxu0
        %990 = vmatprep.mubr.f32.mxu0 0.0
        %991 = vmatmul.mubr.f32.gmra.mrb[0].mxu0 %v856
        %v992 = vpop.f32.mrb[0].mxu0
        %v993 = vadd.f32 0.0, %v992
        %v994 = vpop.f32.mrb[0].mxu0
        %995 = vmatprep.mubr.f32.mxu0 0.0
        %996 = vmatmul.mubr.f32.gmra.mrb[0].mxu0 %v859
        %v997 = vpop.f32.mrb[0].mxu0
        %v998 = vadd.f32 0.0, %v997
        %v999 = vpop.f32.mrb[0].mxu0
        %1000 = vmatprep.mubr.f32.mxu0 0.0
        %1001 = vmatmul.mubr.f32.gmra.mrb[0].mxu0 %v862
        %v1002 = vpop.f32.mrb[0].mxu0
        %v1003 = vadd.f32 0.0, %v1002
        %v1004 = vpop.f32.mrb[0].mxu0
        %1005 = vmatprep.mubr.f32.mxu0 0.0
        %1006 = vmatmul.mubr.f32.gmra.mrb[0].mxu0 %v865
        %v1007 = vpop.f32.mrb[0].mxu0
        %v1008 = vadd.f32 0.0, %v1007
        %v1009 = vpop.f32.mrb[0].mxu0
        %1010 = vmatprep.mubr.f32.mxu0 0.0
        %1011 = vmatmul.mubr.f32.gmra.mrb[0].mxu0 %v868
        %v1012 = vpop.f32.mrb[0].mxu0
        %v1013 = vadd.f32 0.0, %v1012
        %v1014 = vpop.f32.mrb[0].mxu0
        %1015 = vmatprep.mubr.f32.mxu0 0.0
        %1016 = vmatmul.mubr.f32.gmra.mrb[0].mxu0 %v871
        %v1017 = vpop.f32.mrb[0].mxu0
        %v1018 = vadd.f32 0.0, %v1017
        %v1019 = vpop.f32.mrb[0].mxu0
        %1020 = vdwg.mxu0
        %v1021 = vadd.f32 %v731, %v943
        %v1022 = vadd.f32 %v736, %v948
        %v1023 = vadd.f32 %v741, %v953
        %v1024 = vadd.f32 %v746, %v958
        %v1025 = vadd.f32 %v751, %v963
        %v1026 = vadd.f32 %v756, %v968
        %v1027 = vadd.f32 %v761, %v973
        %v1028 = vadd.f32 %v766, %v978
        %v1029 = vadd.f32 %v771, %v983
        %v1030 = vadd.f32 %v776, %v988
        %v1031 = vadd.f32 %v781, %v993
        %v1032 = vadd.f32 %v786, %v998
        %v1033 = vadd.f32 %v791, %v1003
        %v1034 = vadd.f32 %v796, %v1008
        %v1035 = vadd.f32 %v801, %v1013
        %v1036 = vadd.f32 %v806, %v1018
        %s1037 = sadd.s32 %s371, 2
        %s1038 = smul.u32 %s1037, 24
        %s1039 = scalar_lea.vmem [#allocation2], %s1038
        %v1040 = vld [vmem:[%s1039] sm:$0xff]
        %v1041 = vld [vmem:[%s1039 + $0x8] sm:$0xff]
        %v1042 = vld [vmem:[%s1039 + $0x18] sm:$0xff]
        %v1043 = vld [vmem:[%s1039 + $0x20] sm:$0xff]
        %v1044 = vld [vmem:[%s1039 + $0x30] sm:$0xff]
        %v1045 = vld [vmem:[%s1039 + $0x38] sm:$0xff]
        %v1046 = vld [vmem:[%s1039 + $0x48] sm:$0xff]
        %v1047 = vld [vmem:[%s1039 + $0x50] sm:$0xff]
        %v1048 = vld [vmem:[%s1039 + $0x60] sm:$0xff]
        %v1049 = vld [vmem:[%s1039 + $0x68] sm:$0xff]
        %v1050 = vld [vmem:[%s1039 + $0x78] sm:$0xff]
        %v1051 = vld [vmem:[%s1039 + $0x80] sm:$0xff]
        %v1052 = vld [vmem:[%s1039 + $0x90] sm:$0xff]
        %v1053 = vld [vmem:[%s1039 + $0x98] sm:$0xff]
        %v1054 = vld [vmem:[%s1039 + $0xa8] sm:$0xff]
        %v1055 = vld [vmem:[%s1039 + $0xb0] sm:$0xff]
        %v1057 = vsel %vm415, %v1040, 0
        %v1060 = vsel %vm415, %v1041, 0
        %v1063 = vsel %vm415, %v1042, 0
        %v1066 = vsel %vm415, %v1043, 0
        %v1069 = vsel %vm415, %v1044, 0
        %v1072 = vsel %vm415, %v1045, 0
        %v1075 = vsel %vm415, %v1046, 0
        %v1078 = vsel %vm415, %v1047, 0
        %v1081 = vsel %vm415, %v1048, 0
        %v1084 = vsel %vm415, %v1049, 0
        %v1087 = vsel %vm415, %v1050, 0
        %v1090 = vsel %vm415, %v1051, 0
        %v1093 = vsel %vm415, %v1052, 0
        %v1096 = vsel %vm415, %v1053, 0
        %v1099 = vsel %vm415, %v1054, 0
        %v1102 = vsel %vm415, %v1055, 0
        %v1105 = vsel %vm464, %v375, 0
        %1107 = vmatprep.subr.mxu0 0.0
        %1108 = vmatpush1.msra.mxu0 %v1105
        %1109 = vmatprep.subr.mxu0 0.0
        %1110 = vmatpush1.msra.mxu0 0.0
        %1111 = vmatprep.subr.mxu0 0.0
        %1112 = vmatpush1.msra.mxu0 0.0
        %1113 = vmatprep.subr.mxu0 0.0
        %1114 = vmatpush1.msra.mxu0 0.0
        %1115 = vmatprep.subr.mxu0 0.0
        %1116 = vmatpush1.msra.mxu0 0.0
        %1117 = vmatprep.subr.mxu0 0.0
        %1118 = vmatpush1.msra.mxu0 0.0
        %1119 = vmatprep.subr.mxu0 0.0
        %1120 = vmatpush1.msra.mxu0 0.0
        %1121 = vmatprep.subr.mxu0 0.0
        %1122 = vmatpush1.msra.mxu0 0.0
        %1123 = vmatprep.subr.mxu0 0.0
        %1124 = vmatpush1.msra.mxu0 0.0
        %1125 = vmatprep.subr.mxu0 0.0
        %1126 = vmatpush1.msra.mxu0 0.0
        %1127 = vmatprep.subr.mxu0 0.0
        %1128 = vmatpush1.msra.mxu0 0.0
        %1129 = vmatprep.subr.mxu0 0.0
        %1130 = vmatpush1.msra.mxu0 0.0
        %1131 = vmatprep.subr.mxu0 0.0
        %1132 = vmatpush1.msra.mxu0 0.0
        %1133 = vmatprep.subr.mxu0 0.0
        %1134 = vmatpush1.msra.mxu0 0.0
        %1135 = vmatprep.subr.mxu0 0.0
        %1136 = vmatpush1.msra.mxu0 0.0
        %1137 = vmatprep.subr.mxu0 0.0
        %1138 = vmatpush1.msra.mxu0 0.0
        %1139 = vmatprep.subr.mxu0 0.0
        %1140 = vmatpush1.msra.mxu0 0.0
        %1141 = vmatprep.subr.mxu0 0.0
        %1142 = vmatpush1.msra.mxu0 0.0
        %1143 = vmatprep.subr.mxu0 0.0
        %1144 = vmatpush1.msra.mxu0 0.0
        %1145 = vmatprep.subr.mxu0 0.0
        %1146 = vmatpush1.msra.mxu0 0.0
        %1147 = vmatprep.subr.mxu0 0.0
        %1148 = vmatpush1.msra.mxu0 0.0
        %1149 = vmatprep.subr.mxu0 0.0
        %1150 = vmatpush1.msra.mxu0 0.0
        %1151 = vmatprep.subr.mxu0 0.0
        %1152 = vmatpush1.msra.mxu0 0.0
        %1153 = vmatprep.subr.mxu0 0.0
        %1154 = vmatpush1.msra.mxu0 0.0
        %1155 = vmatprep.subr.mxu0 0.0
        %1156 = vmatpush1.msra.mxu0 0.0
        %1157 = vmatprep.subr.mxu0 0.0
        %1158 = vmatpush1.msra.mxu0 0.0
        %1159 = vmatprep.subr.mxu0 0.0
        %1160 = vmatpush1.msra.mxu0 0.0
        %1161 = vmatprep.subr.mxu0 0.0
        %1162 = vmatpush1.msra.mxu0 0.0
        %1163 = vmatprep.subr.mxu0 0.0
        %1164 = vmatpush1.msra.mxu0 0.0
        %1165 = vmatprep.subr.mxu0 0.0
        %1166 = vmatpush1.msra.mxu0 0.0
        %1167 = vmatprep.subr.mxu0 0.0
        %1168 = vmatpush1.msra.mxu0 0.0
        %1169 = vmatprep.subr.mxu0 0.0
        %1170 = vmatpush1.msra.mxu0 0.0
        %1171 = vmatprep.mubr.f32.mxu0 0.0
        %1172 = vmatmul.mubr.f32.gmra.mrb[0].mxu0 %v1057
        %v1173 = vpop.f32.mrb[0].mxu0
        %v1174 = vadd.f32 0.0, %v1173
        %v1175 = vpop.f32.mrb[0].mxu0
        %1176 = vmatprep.mubr.f32.mxu0 0.0
        %1177 = vmatmul.mubr.f32.gmra.mrb[0].mxu0 %v1060
        %v1178 = vpop.f32.mrb[0].mxu0
        %v1179 = vadd.f32 0.0, %v1178
        %v1180 = vpop.f32.mrb[0].mxu0
        %1181 = vmatprep.mubr.f32.mxu0 0.0
        %1182 = vmatmul.mubr.f32.gmra.mrb[0].mxu0 %v1063
        %v1183 = vpop.f32.mrb[0].mxu0
        %v1184 = vadd.f32 0.0, %v1183
        %v1185 = vpop.f32.mrb[0].mxu0
        %1186 = vmatprep.mubr.f32.mxu0 0.0
        %1187 = vmatmul.mubr.f32.gmra.mrb[0].mxu0 %v1066
        %v1188 = vpop.f32.mrb[0].mxu0
        %v1189 = vadd.f32 0.0, %v1188
        %v1190 = vpop.f32.mrb[0].mxu0
        %1191 = vmatprep.mubr.f32.mxu0 0.0
        %1192 = vmatmul.mubr.f32.gmra.mrb[0].mxu0 %v1069
        %v1193 = vpop.f32.mrb[0].mxu0
        %v1194 = vadd.f32 0.0, %v1193
        %v1195 = vpop.f32.mrb[0].mxu0
        %1196 = vmatprep.mubr.f32.mxu0 0.0
        %1197 = vmatmul.mubr.f32.gmra.mrb[0].mxu0 %v1072
        %v1198 = vpop.f32.mrb[0].mxu0
        %v1199 = vadd.f32 0.0, %v1198
        %v1200 = vpop.f32.mrb[0].mxu0
        %1201 = vmatprep.mubr.f32.mxu0 0.0
        %1202 = vmatmul.mubr.f32.gmra.mrb[0].mxu0 %v1075
        %v1203 = vpop.f32.mrb[0].mxu0
        %v1204 = vadd.f32 0.0, %v1203
        %v1205 = vpop.f32.mrb[0].mxu0
        %1206 = vmatprep.mubr.f32.mxu0 0.0
        %1207 = vmatmul.mubr.f32.gmra.mrb[0].mxu0 %v1078
        %v1208 = vpop.f32.mrb[0].mxu0
        %v1209 = vadd.f32 0.0, %v1208
        %v1210 = vpop.f32.mrb[0].mxu0
        %1211 = vmatprep.mubr.f32.mxu0 0.0
        %1212 = vmatmul.mubr.f32.gmra.mrb[0].mxu0 %v1081
        %v1213 = vpop.f32.mrb[0].mxu0
        %v1214 = vadd.f32 0.0, %v1213
        %v1215 = vpop.f32.mrb[0].mxu0
        %1216 = vmatprep.mubr.f32.mxu0 0.0
        %1217 = vmatmul.mubr.f32.gmra.mrb[0].mxu0 %v1084
        %v1218 = vpop.f32.mrb[0].mxu0
        %v1219 = vadd.f32 0.0, %v1218
        %v1220 = vpop.f32.mrb[0].mxu0
        %1221 = vmatprep.mubr.f32.mxu0 0.0
        %1222 = vmatmul.mubr.f32.gmra.mrb[0].mxu0 %v1087
        %v1223 = vpop.f32.mrb[0].mxu0
        %v1224 = vadd.f32 0.0, %v1223
        %v1225 = vpop.f32.mrb[0].mxu0
        %1226 = vmatprep.mubr.f32.mxu0 0.0
        %1227 = vmatmul.mubr.f32.gmra.mrb[0].mxu0 %v1090
        %v1228 = vpop.f32.mrb[0].mxu0
        %v1229 = vadd.f32 0.0, %v1228
        %v1230 = vpop.f32.mrb[0].mxu0
        %1231 = vmatprep.mubr.f32.mxu0 0.0
        %1232 = vmatmul.mubr.f32.gmra.mrb[0].mxu0 %v1093
        %v1233 = vpop.f32.mrb[0].mxu0
        %v1234 = vadd.f32 0.0, %v1233
        %v1235 = vpop.f32.mrb[0].mxu0
        %1236 = vmatprep.mubr.f32.mxu0 0.0
        %1237 = vmatmul.mubr.f32.gmra.mrb[0].mxu0 %v1096
        %v1238 = vpop.f32.mrb[0].mxu0
        %v1239 = vadd.f32 0.0, %v1238
        %v1240 = vpop.f32.mrb[0].mxu0
        %1241 = vmatprep.mubr.f32.mxu0 0.0
        %1242 = vmatmul.mubr.f32.gmra.mrb[0].mxu0 %v1099
        %v1243 = vpop.f32.mrb[0].mxu0
        %v1244 = vadd.f32 0.0, %v1243
        %v1245 = vpop.f32.mrb[0].mxu0
        %1246 = vmatprep.mubr.f32.mxu0 0.0
        %1247 = vmatmul.mubr.f32.gmra.mrb[0].mxu0 %v1102
        %v1248 = vpop.f32.mrb[0].mxu0
        %v1249 = vadd.f32 0.0, %v1248
        %v1250 = vpop.f32.mrb[0].mxu0
        %1251 = vdwg.mxu0
        %v1252 = vadd.f32 %v1021, %v1174
        %v1253 = vadd.f32 %v1022, %v1179
        %v1254 = vadd.f32 %v1023, %v1184
        %v1255 = vadd.f32 %v1024, %v1189
        %v1256 = vadd.f32 %v1025, %v1194
        %v1257 = vadd.f32 %v1026, %v1199
        %v1258 = vadd.f32 %v1027, %v1204
        %v1259 = vadd.f32 %v1028, %v1209
        %v1260 = vadd.f32 %v1029, %v1214
        %v1261 = vadd.f32 %v1030, %v1219
        %v1262 = vadd.f32 %v1031, %v1224
        %v1263 = vadd.f32 %v1032, %v1229
        %v1264 = vadd.f32 %v1033, %v1234
        %v1265 = vadd.f32 %v1034, %v1239
        %v1266 = vadd.f32 %v1035, %v1244
        %v1267 = vadd.f32 %v1036, %v1249
        %v1268 = vld [vmem:[%s1039 + $0x2] sm:$0xff]
        %v1269 = vld [vmem:[%s1039 + $0xa] sm:$0xff]
        %v1270 = vld [vmem:[%s1039 + $0x1a] sm:$0xff]
        %v1271 = vld [vmem:[%s1039 + $0x22] sm:$0xff]
        %v1272 = vld [vmem:[%s1039 + $0x32] sm:$0xff]
        %v1273 = vld [vmem:[%s1039 + $0x3a] sm:$0xff]
        %v1274 = vld [vmem:[%s1039 + $0x4a] sm:$0xff]
        %v1275 = vld [vmem:[%s1039 + $0x52] sm:$0xff]
        %v1276 = vld [vmem:[%s1039 + $0x62] sm:$0xff]
        %v1277 = vld [vmem:[%s1039 + $0x6a] sm:$0xff]
        %v1278 = vld [vmem:[%s1039 + $0x7a] sm:$0xff]
        %v1279 = vld [vmem:[%s1039 + $0x82] sm:$0xff]
        %v1280 = vld [vmem:[%s1039 + $0x92] sm:$0xff]
        %v1281 = vld [vmem:[%s1039 + $0x9a] sm:$0xff]
        %v1282 = vld [vmem:[%s1039 + $0xaa] sm:$0xff]
        %v1283 = vld [vmem:[%s1039 + $0xb2] sm:$0xff]
        %v1285 = vsel %vm415, %v1268, 0
        %v1288 = vsel %vm415, %v1269, 0
        %v1291 = vsel %vm415, %v1270, 0
        %v1294 = vsel %vm415, %v1271, 0
        %v1297 = vsel %vm415, %v1272, 0
        %v1300 = vsel %vm415, %v1273, 0
        %v1303 = vsel %vm415, %v1274, 0
        %v1306 = vsel %vm415, %v1275, 0
        %v1309 = vsel %vm415, %v1276, 0
        %v1312 = vsel %vm415, %v1277, 0
        %v1315 = vsel %vm415, %v1278, 0
        %v1318 = vsel %vm415, %v1279, 0
        %v1321 = vsel %vm415, %v1280, 0
        %v1324 = vsel %vm415, %v1281, 0
        %v1327 = vsel %vm415, %v1282, 0
        %v1330 = vsel %vm415, %v1283, 0
        %v1333 = vsel %vm464, %v376, 0
        %1335 = vmatprep.subr.mxu0 0.0
        %1336 = vmatpush1.msra.mxu0 %v1333
        %1337 = vmatprep.subr.mxu0 0.0
        %1338 = vmatpush1.msra.mxu0 0.0
        %1339 = vmatprep.subr.mxu0 0.0
        %1340 = vmatpush1.msra.mxu0 0.0
        %1341 = vmatprep.subr.mxu0 0.0
        %1342 = vmatpush1.msra.mxu0 0.0
        %1343 = vmatprep.subr.mxu0 0.0
        %1344 = vmatpush1.msra.mxu0 0.0
        %1345 = vmatprep.subr.mxu0 0.0
        %1346 = vmatpush1.msra.mxu0 0.0
        %1347 = vmatprep.subr.mxu0 0.0
        %1348 = vmatpush1.msra.mxu0 0.0
        %1349 = vmatprep.subr.mxu0 0.0
        %1350 = vmatpush1.msra.mxu0 0.0
        %1351 = vmatprep.subr.mxu0 0.0
        %1352 = vmatpush1.msra.mxu0 0.0
        %1353 = vmatprep.subr.mxu0 0.0
        %1354 = vmatpush1.msra.mxu0 0.0
        %1355 = vmatprep.subr.mxu0 0.0
        %1356 = vmatpush1.msra.mxu0 0.0
        %1357 = vmatprep.subr.mxu0 0.0
        %1358 = vmatpush1.msra.mxu0 0.0
        %1359 = vmatprep.subr.mxu0 0.0
        %1360 = vmatpush1.msra.mxu0 0.0
        %1361 = vmatprep.subr.mxu0 0.0
        %1362 = vmatpush1.msra.mxu0 0.0
        %1363 = vmatprep.subr.mxu0 0.0
        %1364 = vmatpush1.msra.mxu0 0.0
        %1365 = vmatprep.subr.mxu0 0.0
        %1366 = vmatpush1.msra.mxu0 0.0
        %1367 = vmatprep.subr.mxu0 0.0
        %1368 = vmatpush1.msra.mxu0 0.0
        %1369 = vmatprep.subr.mxu0 0.0
        %1370 = vmatpush1.msra.mxu0 0.0
        %1371 = vmatprep.subr.mxu0 0.0
        %1372 = vmatpush1.msra.mxu0 0.0
        %1373 = vmatprep.subr.mxu0 0.0
        %1374 = vmatpush1.msra.mxu0 0.0
        %1375 = vmatprep.subr.mxu0 0.0
        %1376 = vmatpush1.msra.mxu0 0.0
        %1377 = vmatprep.subr.mxu0 0.0
        %1378 = vmatpush1.msra.mxu0 0.0
        %1379 = vmatprep.subr.mxu0 0.0
        %1380 = vmatpush1.msra.mxu0 0.0
        %1381 = vmatprep.subr.mxu0 0.0
        %1382 = vmatpush1.msra.mxu0 0.0
        %1383 = vmatprep.subr.mxu0 0.0
        %1384 = vmatpush1.msra.mxu0 0.0
        %1385 = vmatprep.subr.mxu0 0.0
        %1386 = vmatpush1.msra.mxu0 0.0
        %1387 = vmatprep.subr.mxu0 0.0
        %1388 = vmatpush1.msra.mxu0 0.0
        %1389 = vmatprep.subr.mxu0 0.0
        %1390 = vmatpush1.msra.mxu0 0.0
        %1391 = vmatprep.subr.mxu0 0.0
        %1392 = vmatpush1.msra.mxu0 0.0
        %1393 = vmatprep.subr.mxu0 0.0
        %1394 = vmatpush1.msra.mxu0 0.0
        %1395 = vmatprep.subr.mxu0 0.0
        %1396 = vmatpush1.msra.mxu0 0.0
        %1397 = vmatprep.subr.mxu0 0.0
        %1398 = vmatpush1.msra.mxu0 0.0
        %1399 = vmatprep.mubr.f32.mxu0 0.0
        %1400 = vmatmul.mubr.f32.gmra.mrb[0].mxu0 %v1285
        %v1401 = vpop.f32.mrb[0].mxu0
        %v1402 = vadd.f32 0.0, %v1401
        %v1403 = vpop.f32.mrb[0].mxu0
        %1404 = vmatprep.mubr.f32.mxu0 0.0
        %1405 = vmatmul.mubr.f32.gmra.mrb[0].mxu0 %v1288
        %v1406 = vpop.f32.mrb[0].mxu0
        %v1407 = vadd.f32 0.0, %v1406
        %v1408 = vpop.f32.mrb[0].mxu0
        %1409 = vmatprep.mubr.f32.mxu0 0.0
        %1410 = vmatmul.mubr.f32.gmra.mrb[0].mxu0 %v1291
        %v1411 = vpop.f32.mrb[0].mxu0
        %v1412 = vadd.f32 0.0, %v1411
        %v1413 = vpop.f32.mrb[0].mxu0
        %1414 = vmatprep.mubr.f32.mxu0 0.0
        %1415 = vmatmul.mubr.f32.gmra.mrb[0].mxu0 %v1294
        %v1416 = vpop.f32.mrb[0].mxu0
        %v1417 = vadd.f32 0.0, %v1416
        %v1418 = vpop.f32.mrb[0].mxu0
        %1419 = vmatprep.mubr.f32.mxu0 0.0
        %1420 = vmatmul.mubr.f32.gmra.mrb[0].mxu0 %v1297
        %v1421 = vpop.f32.mrb[0].mxu0
        %v1422 = vadd.f32 0.0, %v1421
        %v1423 = vpop.f32.mrb[0].mxu0
        %1424 = vmatprep.mubr.f32.mxu0 0.0
        %1425 = vmatmul.mubr.f32.gmra.mrb[0].mxu0 %v1300
        %v1426 = vpop.f32.mrb[0].mxu0
        %v1427 = vadd.f32 0.0, %v1426
        %v1428 = vpop.f32.mrb[0].mxu0
        %1429 = vmatprep.mubr.f32.mxu0 0.0
        %1430 = vmatmul.mubr.f32.gmra.mrb[0].mxu0 %v1303
        %v1431 = vpop.f32.mrb[0].mxu0
        %v1432 = vadd.f32 0.0, %v1431
        %v1433 = vpop.f32.mrb[0].mxu0
        %1434 = vmatprep.mubr.f32.mxu0 0.0
        %1435 = vmatmul.mubr.f32.gmra.mrb[0].mxu0 %v1306
        %v1436 = vpop.f32.mrb[0].mxu0
        %v1437 = vadd.f32 0.0, %v1436
        %v1438 = vpop.f32.mrb[0].mxu0
        %1439 = vmatprep.mubr.f32.mxu0 0.0
        %1440 = vmatmul.mubr.f32.gmra.mrb[0].mxu0 %v1309
        %v1441 = vpop.f32.mrb[0].mxu0
        %v1442 = vadd.f32 0.0, %v1441
        %v1443 = vpop.f32.mrb[0].mxu0
        %1444 = vmatprep.mubr.f32.mxu0 0.0
        %1445 = vmatmul.mubr.f32.gmra.mrb[0].mxu0 %v1312
        %v1446 = vpop.f32.mrb[0].mxu0
        %v1447 = vadd.f32 0.0, %v1446
        %v1448 = vpop.f32.mrb[0].mxu0
        %1449 = vmatprep.mubr.f32.mxu0 0.0
        %1450 = vmatmul.mubr.f32.gmra.mrb[0].mxu0 %v1315
        %v1451 = vpop.f32.mrb[0].mxu0
        %v1452 = vadd.f32 0.0, %v1451
        %v1453 = vpop.f32.mrb[0].mxu0
        %1454 = vmatprep.mubr.f32.mxu0 0.0
        %1455 = vmatmul.mubr.f32.gmra.mrb[0].mxu0 %v1318
        %v1456 = vpop.f32.mrb[0].mxu0
        %v1457 = vadd.f32 0.0, %v1456
        %v1458 = vpop.f32.mrb[0].mxu0
        %1459 = vmatprep.mubr.f32.mxu0 0.0
        %1460 = vmatmul.mubr.f32.gmra.mrb[0].mxu0 %v1321
        %v1461 = vpop.f32.mrb[0].mxu0
        %v1462 = vadd.f32 0.0, %v1461
        %v1463 = vpop.f32.mrb[0].mxu0
        %1464 = vmatprep.mubr.f32.mxu0 0.0
        %1465 = vmatmul.mubr.f32.gmra.mrb[0].mxu0 %v1324
        %v1466 = vpop.f32.mrb[0].mxu0
        %v1467 = vadd.f32 0.0, %v1466
        %v1468 = vpop.f32.mrb[0].mxu0
        %1469 = vmatprep.mubr.f32.mxu0 0.0
        %1470 = vmatmul.mubr.f32.gmra.mrb[0].mxu0 %v1327
        %v1471 = vpop.f32.mrb[0].mxu0
        %v1472 = vadd.f32 0.0, %v1471
        %v1473 = vpop.f32.mrb[0].mxu0
        %1474 = vmatprep.mubr.f32.mxu0 0.0
        %1475 = vmatmul.mubr.f32.gmra.mrb[0].mxu0 %v1330
        %v1476 = vpop.f32.mrb[0].mxu0
        %v1477 = vadd.f32 0.0, %v1476
        %v1478 = vpop.f32.mrb[0].mxu0
        %1479 = vdwg.mxu0
        %v1480 = vadd.f32 %v1252, %v1402
        %v1481 = vadd.f32 %v1253, %v1407
        %v1482 = vadd.f32 %v1254, %v1412
        %v1483 = vadd.f32 %v1255, %v1417
        %v1484 = vadd.f32 %v1256, %v1422
        %v1485 = vadd.f32 %v1257, %v1427
        %v1486 = vadd.f32 %v1258, %v1432
        %v1487 = vadd.f32 %v1259, %v1437
        %v1488 = vadd.f32 %v1260, %v1442
        %v1489 = vadd.f32 %v1261, %v1447
        %v1490 = vadd.f32 %v1262, %v1452
        %v1491 = vadd.f32 %v1263, %v1457
        %v1492 = vadd.f32 %v1264, %v1462
        %v1493 = vadd.f32 %v1265, %v1467
        %v1494 = vadd.f32 %v1266, %v1472
        %v1495 = vadd.f32 %v1267, %v1477
        %v1496 = vld [vmem:[%s1039 + $0x4] sm:$0xff]
        %v1497 = vld [vmem:[%s1039 + $0xc] sm:$0xff]
        %v1498 = vld [vmem:[%s1039 + $0x1c] sm:$0xff]
        %v1499 = vld [vmem:[%s1039 + $0x24] sm:$0xff]
        %v1500 = vld [vmem:[%s1039 + $0x34] sm:$0xff]
        %v1501 = vld [vmem:[%s1039 + $0x3c] sm:$0xff]
        %v1502 = vld [vmem:[%s1039 + $0x4c] sm:$0xff]
        %v1503 = vld [vmem:[%s1039 + $0x54] sm:$0xff]
        %v1504 = vld [vmem:[%s1039 + $0x64] sm:$0xff]
        %v1505 = vld [vmem:[%s1039 + $0x6c] sm:$0xff]
        %v1506 = vld [vmem:[%s1039 + $0x7c] sm:$0xff]
        %v1507 = vld [vmem:[%s1039 + $0x84] sm:$0xff]
        %v1508 = vld [vmem:[%s1039 + $0x94] sm:$0xff]
        %v1509 = vld [vmem:[%s1039 + $0x9c] sm:$0xff]
        %v1510 = vld [vmem:[%s1039 + $0xac] sm:$0xff]
        %v1511 = vld [vmem:[%s1039 + $0xb4] sm:$0xff]
        %v1513 = vsel %vm415, %v1496, 0
        %v1516 = vsel %vm415, %v1497, 0
        %v1519 = vsel %vm415, %v1498, 0
        %v1522 = vsel %vm415, %v1499, 0
        %v1525 = vsel %vm415, %v1500, 0
        %v1528 = vsel %vm415, %v1501, 0
        %v1531 = vsel %vm415, %v1502, 0
        %v1534 = vsel %vm415, %v1503, 0
        %v1537 = vsel %vm415, %v1504, 0
        %v1540 = vsel %vm415, %v1505, 0
        %v1543 = vsel %vm415, %v1506, 0
        %v1546 = vsel %vm415, %v1507, 0
        %v1549 = vsel %vm415, %v1508, 0
        %v1552 = vsel %vm415, %v1509, 0
        %v1555 = vsel %vm415, %v1510, 0
        %v1558 = vsel %vm415, %v1511, 0
        %v1561 = vsel %vm464, %v377, 0
        %1563 = vmatprep.subr.mxu0 0.0
        %1564 = vmatpush1.msra.mxu0 %v1561
        %1565 = vmatprep.subr.mxu0 0.0
        %1566 = vmatpush1.msra.mxu0 0.0
        %1567 = vmatprep.subr.mxu0 0.0
        %1568 = vmatpush1.msra.mxu0 0.0
        %1569 = vmatprep.subr.mxu0 0.0
        %1570 = vmatpush1.msra.mxu0 0.0
        %1571 = vmatprep.subr.mxu0 0.0
        %1572 = vmatpush1.msra.mxu0 0.0
        %1573 = vmatprep.subr.mxu0 0.0
        %1574 = vmatpush1.msra.mxu0 0.0
        %1575 = vmatprep.subr.mxu0 0.0
        %1576 = vmatpush1.msra.mxu0 0.0
        %1577 = vmatprep.subr.mxu0 0.0
        %1578 = vmatpush1.msra.mxu0 0.0
        %1579 = vmatprep.subr.mxu0 0.0
        %1580 = vmatpush1.msra.mxu0 0.0
        %1581 = vmatprep.subr.mxu0 0.0
        %1582 = vmatpush1.msra.mxu0 0.0
        %1583 = vmatprep.subr.mxu0 0.0
        %1584 = vmatpush1.msra.mxu0 0.0
        %1585 = vmatprep.subr.mxu0 0.0
        %1586 = vmatpush1.msra.mxu0 0.0
        %1587 = vmatprep.subr.mxu0 0.0
        %1588 = vmatpush1.msra.mxu0 0.0
        %1589 = vmatprep.subr.mxu0 0.0
        %1590 = vmatpush1.msra.mxu0 0.0
        %1591 = vmatprep.subr.mxu0 0.0
        %1592 = vmatpush1.msra.mxu0 0.0
        %1593 = vmatprep.subr.mxu0 0.0
        %1594 = vmatpush1.msra.mxu0 0.0
        %1595 = vmatprep.subr.mxu0 0.0
        %1596 = vmatpush1.msra.mxu0 0.0
        %1597 = vmatprep.subr.mxu0 0.0
        %1598 = vmatpush1.msra.mxu0 0.0
        %1599 = vmatprep.subr.mxu0 0.0
        %1600 = vmatpush1.msra.mxu0 0.0
        %1601 = vmatprep.subr.mxu0 0.0
        %1602 = vmatpush1.msra.mxu0 0.0
        %1603 = vmatprep.subr.mxu0 0.0
        %1604 = vmatpush1.msra.mxu0 0.0
        %1605 = vmatprep.subr.mxu0 0.0
        %1606 = vmatpush1.msra.mxu0 0.0
        %1607 = vmatprep.subr.mxu0 0.0
        %1608 = vmatpush1.msra.mxu0 0.0
        %1609 = vmatprep.subr.mxu0 0.0
        %1610 = vmatpush1.msra.mxu0 0.0
        %1611 = vmatprep.subr.mxu0 0.0
        %1612 = vmatpush1.msra.mxu0 0.0
        %1613 = vmatprep.subr.mxu0 0.0
        %1614 = vmatpush1.msra.mxu0 0.0
        %1615 = vmatprep.subr.mxu0 0.0
        %1616 = vmatpush1.msra.mxu0 0.0
        %1617 = vmatprep.subr.mxu0 0.0
        %1618 = vmatpush1.msra.mxu0 0.0
        %1619 = vmatprep.subr.mxu0 0.0
        %1620 = vmatpush1.msra.mxu0 0.0
        %1621 = vmatprep.subr.mxu0 0.0
        %1622 = vmatpush1.msra.mxu0 0.0
        %1623 = vmatprep.subr.mxu0 0.0
        %1624 = vmatpush1.msra.mxu0 0.0
        %1625 = vmatprep.subr.mxu0 0.0
        %1626 = vmatpush1.msra.mxu0 0.0
        %1627 = vmatprep.mubr.f32.mxu0 0.0
        %1628 = vmatmul.mubr.f32.gmra.mrb[0].mxu0 %v1513
        %v1629 = vpop.f32.mrb[0].mxu0
        %v1630 = vadd.f32 0.0, %v1629
        %v1631 = vpop.f32.mrb[0].mxu0
        %1632 = vmatprep.mubr.f32.mxu0 0.0
        %1633 = vmatmul.mubr.f32.gmra.mrb[0].mxu0 %v1516
        %v1634 = vpop.f32.mrb[0].mxu0
        %v1635 = vadd.f32 0.0, %v1634
        %v1636 = vpop.f32.mrb[0].mxu0
        %1637 = vmatprep.mubr.f32.mxu0 0.0
        %1638 = vmatmul.mubr.f32.gmra.mrb[0].mxu0 %v1519
        %v1639 = vpop.f32.mrb[0].mxu0
        %v1640 = vadd.f32 0.0, %v1639
        %v1641 = vpop.f32.mrb[0].mxu0
        %1642 = vmatprep.mubr.f32.mxu0 0.0
        %1643 = vmatmul.mubr.f32.gmra.mrb[0].mxu0 %v1522
        %v1644 = vpop.f32.mrb[0].mxu0
        %v1645 = vadd.f32 0.0, %v1644
        %v1646 = vpop.f32.mrb[0].mxu0
        %1647 = vmatprep.mubr.f32.mxu0 0.0
        %1648 = vmatmul.mubr.f32.gmra.mrb[0].mxu0 %v1525
        %v1649 = vpop.f32.mrb[0].mxu0
        %v1650 = vadd.f32 0.0, %v1649
        %v1651 = vpop.f32.mrb[0].mxu0
        %1652 = vmatprep.mubr.f32.mxu0 0.0
        %1653 = vmatmul.mubr.f32.gmra.mrb[0].mxu0 %v1528
        %v1654 = vpop.f32.mrb[0].mxu0
        %v1655 = vadd.f32 0.0, %v1654
        %v1656 = vpop.f32.mrb[0].mxu0
        %1657 = vmatprep.mubr.f32.mxu0 0.0
        %1658 = vmatmul.mubr.f32.gmra.mrb[0].mxu0 %v1531
        %v1659 = vpop.f32.mrb[0].mxu0
        %v1660 = vadd.f32 0.0, %v1659
        %v1661 = vpop.f32.mrb[0].mxu0
        %1662 = vmatprep.mubr.f32.mxu0 0.0
        %1663 = vmatmul.mubr.f32.gmra.mrb[0].mxu0 %v1534
        %v1664 = vpop.f32.mrb[0].mxu0
        %v1665 = vadd.f32 0.0, %v1664
        %v1666 = vpop.f32.mrb[0].mxu0
        %1667 = vmatprep.mubr.f32.mxu0 0.0
        %1668 = vmatmul.mubr.f32.gmra.mrb[0].mxu0 %v1537
        %v1669 = vpop.f32.mrb[0].mxu0
        %v1670 = vadd.f32 0.0, %v1669
        %v1671 = vpop.f32.mrb[0].mxu0
        %1672 = vmatprep.mubr.f32.mxu0 0.0
        %1673 = vmatmul.mubr.f32.gmra.mrb[0].mxu0 %v1540
        %v1674 = vpop.f32.mrb[0].mxu0
        %v1675 = vadd.f32 0.0, %v1674
        %v1676 = vpop.f32.mrb[0].mxu0
        %1677 = vmatprep.mubr.f32.mxu0 0.0
        %1678 = vmatmul.mubr.f32.gmra.mrb[0].mxu0 %v1543
        %v1679 = vpop.f32.mrb[0].mxu0
        %v1680 = vadd.f32 0.0, %v1679
        %v1681 = vpop.f32.mrb[0].mxu0
        %1682 = vmatprep.mubr.f32.mxu0 0.0
        %1683 = vmatmul.mubr.f32.gmra.mrb[0].mxu0 %v1546
        %v1684 = vpop.f32.mrb[0].mxu0
        %v1685 = vadd.f32 0.0, %v1684
        %v1686 = vpop.f32.mrb[0].mxu0
        %1687 = vmatprep.mubr.f32.mxu0 0.0
        %1688 = vmatmul.mubr.f32.gmra.mrb[0].mxu0 %v1549
        %v1689 = vpop.f32.mrb[0].mxu0
        %v1690 = vadd.f32 0.0, %v1689
        %v1691 = vpop.f32.mrb[0].mxu0
        %1692 = vmatprep.mubr.f32.mxu0 0.0
        %1693 = vmatmul.mubr.f32.gmra.mrb[0].mxu0 %v1552
        %v1694 = vpop.f32.mrb[0].mxu0
        %v1695 = vadd.f32 0.0, %v1694
        %v1696 = vpop.f32.mrb[0].mxu0
        %1697 = vmatprep.mubr.f32.mxu0 0.0
        %1698 = vmatmul.mubr.f32.gmra.mrb[0].mxu0 %v1555
        %v1699 = vpop.f32.mrb[0].mxu0
        %v1700 = vadd.f32 0.0, %v1699
        %v1701 = vpop.f32.mrb[0].mxu0
        %1702 = vmatprep.mubr.f32.mxu0 0.0
        %1703 = vmatmul.mubr.f32.gmra.mrb[0].mxu0 %v1558
        %v1704 = vpop.f32.mrb[0].mxu0
        %v1705 = vadd.f32 0.0, %v1704
        %v1706 = vpop.f32.mrb[0].mxu0
        %1707 = vdwg.mxu0
        %v1708 = vadd.f32 %v1480, %v1630
        %v1709 = vadd.f32 %v1481, %v1635
        %v1710 = vadd.f32 %v1482, %v1640
        %v1711 = vadd.f32 %v1483, %v1645
        %v1712 = vadd.f32 %v1484, %v1650
        %v1713 = vadd.f32 %v1485, %v1655
        %v1714 = vadd.f32 %v1486, %v1660
        %v1715 = vadd.f32 %v1487, %v1665
        %v1716 = vadd.f32 %v1488, %v1670
        %v1717 = vadd.f32 %v1489, %v1675
        %v1718 = vadd.f32 %v1490, %v1680
        %v1719 = vadd.f32 %v1491, %v1685
        %v1720 = vadd.f32 %v1492, %v1690
        %v1721 = vadd.f32 %v1493, %v1695
        %v1722 = vadd.f32 %v1494, %v1700
        %v1723 = vadd.f32 %v1495, %v1705
        %s1724 = sadd.s32 %s371, 4
        %s1725 = smul.u32 %s1724, 24
        %s1726 = scalar_lea.vmem [#allocation2], %s1725
        %v1727 = vld [vmem:[%s1726] sm:$0xff]
        %v1728 = vld [vmem:[%s1726 + $0x8] sm:$0xff]
        %v1729 = vld [vmem:[%s1726 + $0x18] sm:$0xff]
        %v1730 = vld [vmem:[%s1726 + $0x20] sm:$0xff]
        %v1731 = vld [vmem:[%s1726 + $0x30] sm:$0xff]
        %v1732 = vld [vmem:[%s1726 + $0x38] sm:$0xff]
        %v1733 = vld [vmem:[%s1726 + $0x48] sm:$0xff]
        %v1734 = vld [vmem:[%s1726 + $0x50] sm:$0xff]
        %v1735 = vld [vmem:[%s1726 + $0x60] sm:$0xff]
        %v1736 = vld [vmem:[%s1726 + $0x68] sm:$0xff]
        %v1737 = vld [vmem:[%s1726 + $0x78] sm:$0xff]
        %v1738 = vld [vmem:[%s1726 + $0x80] sm:$0xff]
        %v1739 = vld [vmem:[%s1726 + $0x90] sm:$0xff]
        %v1740 = vld [vmem:[%s1726 + $0x98] sm:$0xff]
        %v1741 = vld [vmem:[%s1726 + $0xa8] sm:$0xff]
        %v1742 = vld [vmem:[%s1726 + $0xb0] sm:$0xff]
        %v1744 = vsel %vm415, %v1727, 0
        %v1747 = vsel %vm415, %v1728, 0
        %v1750 = vsel %vm415, %v1729, 0
        %v1753 = vsel %vm415, %v1730, 0
        %v1756 = vsel %vm415, %v1731, 0
        %v1759 = vsel %vm415, %v1732, 0
        %v1762 = vsel %vm415, %v1733, 0
        %v1765 = vsel %vm415, %v1734, 0
        %v1768 = vsel %vm415, %v1735, 0
        %v1771 = vsel %vm415, %v1736, 0
        %v1774 = vsel %vm415, %v1737, 0
        %v1777 = vsel %vm415, %v1738, 0
        %v1780 = vsel %vm415, %v1739, 0
        %v1783 = vsel %vm415, %v1740, 0
        %v1786 = vsel %vm415, %v1741, 0
        %v1789 = vsel %vm415, %v1742, 0
        %v1792 = vsel %vm464, %v378, 0
        %1794 = vmatprep.subr.mxu0 0.0
        %1795 = vmatpush1.msra.mxu0 %v1792
        %1796 = vmatprep.subr.mxu0 0.0
        %1797 = vmatpush1.msra.mxu0 0.0
        %1798 = vmatprep.subr.mxu0 0.0
        %1799 = vmatpush1.msra.mxu0 0.0
        %1800 = vmatprep.subr.mxu0 0.0
        %1801 = vmatpush1.msra.mxu0 0.0
        %1802 = vmatprep.subr.mxu0 0.0
        %1803 = vmatpush1.msra.mxu0 0.0
        %1804 = vmatprep.subr.mxu0 0.0
        %1805 = vmatpush1.msra.mxu0 0.0
        %1806 = vmatprep.subr.mxu0 0.0
        %1807 = vmatpush1.msra.mxu0 0.0
        %1808 = vmatprep.subr.mxu0 0.0
        %1809 = vmatpush1.msra.mxu0 0.0
        %1810 = vmatprep.subr.mxu0 0.0
        %1811 = vmatpush1.msra.mxu0 0.0
        %1812 = vmatprep.subr.mxu0 0.0
        %1813 = vmatpush1.msra.mxu0 0.0
        %1814 = vmatprep.subr.mxu0 0.0
        %1815 = vmatpush1.msra.mxu0 0.0
        %1816 = vmatprep.subr.mxu0 0.0
        %1817 = vmatpush1.msra.mxu0 0.0
        %1818 = vmatprep.subr.mxu0 0.0
        %1819 = vmatpush1.msra.mxu0 0.0
        %1820 = vmatprep.subr.mxu0 0.0
        %1821 = vmatpush1.msra.mxu0 0.0
        %1822 = vmatprep.subr.mxu0 0.0
        %1823 = vmatpush1.msra.mxu0 0.0
        %1824 = vmatprep.subr.mxu0 0.0
        %1825 = vmatpush1.msra.mxu0 0.0
        %1826 = vmatprep.subr.mxu0 0.0
        %1827 = vmatpush1.msra.mxu0 0.0
        %1828 = vmatprep.subr.mxu0 0.0
        %1829 = vmatpush1.msra.mxu0 0.0
        %1830 = vmatprep.subr.mxu0 0.0
        %1831 = vmatpush1.msra.mxu0 0.0
        %1832 = vmatprep.subr.mxu0 0.0
        %1833 = vmatpush1.msra.mxu0 0.0
        %1834 = vmatprep.subr.mxu0 0.0
        %1835 = vmatpush1.msra.mxu0 0.0
        %1836 = vmatprep.subr.mxu0 0.0
        %1837 = vmatpush1.msra.mxu0 0.0
        %1838 = vmatprep.subr.mxu0 0.0
        %1839 = vmatpush1.msra.mxu0 0.0
        %1840 = vmatprep.subr.mxu0 0.0
        %1841 = vmatpush1.msra.mxu0 0.0
        %1842 = vmatprep.subr.mxu0 0.0
        %1843 = vmatpush1.msra.mxu0 0.0
        %1844 = vmatprep.subr.mxu0 0.0
        %1845 = vmatpush1.msra.mxu0 0.0
        %1846 = vmatprep.subr.mxu0 0.0
        %1847 = vmatpush1.msra.mxu0 0.0
        %1848 = vmatprep.subr.mxu0 0.0
        %1849 = vmatpush1.msra.mxu0 0.0
        %1850 = vmatprep.subr.mxu0 0.0
        %1851 = vmatpush1.msra.mxu0 0.0
        %1852 = vmatprep.subr.mxu0 0.0
        %1853 = vmatpush1.msra.mxu0 0.0
        %1854 = vmatprep.subr.mxu0 0.0
        %1855 = vmatpush1.msra.mxu0 0.0
        %1856 = vmatprep.subr.mxu0 0.0
        %1857 = vmatpush1.msra.mxu0 0.0
        %1858 = vmatprep.mubr.f32.mxu0 0.0
        %1859 = vmatmul.mubr.f32.gmra.mrb[0].mxu0 %v1744
        %v1860 = vpop.f32.mrb[0].mxu0
        %v1861 = vadd.f32 0.0, %v1860
        %v1862 = vpop.f32.mrb[0].mxu0
        %1863 = vmatprep.mubr.f32.mxu0 0.0
        %1864 = vmatmul.mubr.f32.gmra.mrb[0].mxu0 %v1747
        %v1865 = vpop.f32.mrb[0].mxu0
        %v1866 = vadd.f32 0.0, %v1865
        %v1867 = vpop.f32.mrb[0].mxu0
        %1868 = vmatprep.mubr.f32.mxu0 0.0
        %1869 = vmatmul.mubr.f32.gmra.mrb[0].mxu0 %v1750
        %v1870 = vpop.f32.mrb[0].mxu0
        %v1871 = vadd.f32 0.0, %v1870
        %v1872 = vpop.f32.mrb[0].mxu0
        %1873 = vmatprep.mubr.f32.mxu0 0.0
        %1874 = vmatmul.mubr.f32.gmra.mrb[0].mxu0 %v1753
        %v1875 = vpop.f32.mrb[0].mxu0
        %v1876 = vadd.f32 0.0, %v1875
        %v1877 = vpop.f32.mrb[0].mxu0
        %1878 = vmatprep.mubr.f32.mxu0 0.0
        %1879 = vmatmul.mubr.f32.gmra.mrb[0].mxu0 %v1756
        %v1880 = vpop.f32.mrb[0].mxu0
        %v1881 = vadd.f32 0.0, %v1880
        %v1882 = vpop.f32.mrb[0].mxu0
        %1883 = vmatprep.mubr.f32.mxu0 0.0
        %1884 = vmatmul.mubr.f32.gmra.mrb[0].mxu0 %v1759
        %v1885 = vpop.f32.mrb[0].mxu0
        %v1886 = vadd.f32 0.0, %v1885
        %v1887 = vpop.f32.mrb[0].mxu0
        %1888 = vmatprep.mubr.f32.mxu0 0.0
        %1889 = vmatmul.mubr.f32.gmra.mrb[0].mxu0 %v1762
        %v1890 = vpop.f32.mrb[0].mxu0
        %v1891 = vadd.f32 0.0, %v1890
        %v1892 = vpop.f32.mrb[0].mxu0
        %1893 = vmatprep.mubr.f32.mxu0 0.0
        %1894 = vmatmul.mubr.f32.gmra.mrb[0].mxu0 %v1765
        %v1895 = vpop.f32.mrb[0].mxu0
        %v1896 = vadd.f32 0.0, %v1895
        %v1897 = vpop.f32.mrb[0].mxu0
        %1898 = vmatprep.mubr.f32.mxu0 0.0
        %1899 = vmatmul.mubr.f32.gmra.mrb[0].mxu0 %v1768
        %v1900 = vpop.f32.mrb[0].mxu0
        %v1901 = vadd.f32 0.0, %v1900
        %v1902 = vpop.f32.mrb[0].mxu0
        %1903 = vmatprep.mubr.f32.mxu0 0.0
        %1904 = vmatmul.mubr.f32.gmra.mrb[0].mxu0 %v1771
        %v1905 = vpop.f32.mrb[0].mxu0
        %v1906 = vadd.f32 0.0, %v1905
        %v1907 = vpop.f32.mrb[0].mxu0
        %1908 = vmatprep.mubr.f32.mxu0 0.0
        %1909 = vmatmul.mubr.f32.gmra.mrb[0].mxu0 %v1774
        %v1910 = vpop.f32.mrb[0].mxu0
        %v1911 = vadd.f32 0.0, %v1910
        %v1912 = vpop.f32.mrb[0].mxu0
        %1913 = vmatprep.mubr.f32.mxu0 0.0
        %1914 = vmatmul.mubr.f32.gmra.mrb[0].mxu0 %v1777
        %v1915 = vpop.f32.mrb[0].mxu0
        %v1916 = vadd.f32 0.0, %v1915
        %v1917 = vpop.f32.mrb[0].mxu0
        %1918 = vmatprep.mubr.f32.mxu0 0.0
        %1919 = vmatmul.mubr.f32.gmra.mrb[0].mxu0 %v1780
        %v1920 = vpop.f32.mrb[0].mxu0
        %v1921 = vadd.f32 0.0, %v1920
        %v1922 = vpop.f32.mrb[0].mxu0
        %1923 = vmatprep.mubr.f32.mxu0 0.0
        %1924 = vmatmul.mubr.f32.gmra.mrb[0].mxu0 %v1783
        %v1925 = vpop.f32.mrb[0].mxu0
        %v1926 = vadd.f32 0.0, %v1925
        %v1927 = vpop.f32.mrb[0].mxu0
        %1928 = vmatprep.mubr.f32.mxu0 0.0
        %1929 = vmatmul.mubr.f32.gmra.mrb[0].mxu0 %v1786
        %v1930 = vpop.f32.mrb[0].mxu0
        %v1931 = vadd.f32 0.0, %v1930
        %v1932 = vpop.f32.mrb[0].mxu0
        %1933 = vmatprep.mubr.f32.mxu0 0.0
        %1934 = vmatmul.mubr.f32.gmra.mrb[0].mxu0 %v1789
        %v1935 = vpop.f32.mrb[0].mxu0
        %v1936 = vadd.f32 0.0, %v1935
        %v1937 = vpop.f32.mrb[0].mxu0
        %1938 = vdwg.mxu0
        %v1939 = vadd.f32 %v1708, %v1861
        %v1940 = vadd.f32 %v1709, %v1866
        %v1941 = vadd.f32 %v1710, %v1871
        %v1942 = vadd.f32 %v1711, %v1876
        %v1943 = vadd.f32 %v1712, %v1881
        %v1944 = vadd.f32 %v1713, %v1886
        %v1945 = vadd.f32 %v1714, %v1891
        %v1946 = vadd.f32 %v1715, %v1896
        %v1947 = vadd.f32 %v1716, %v1901
        %v1948 = vadd.f32 %v1717, %v1906
        %v1949 = vadd.f32 %v1718, %v1911
        %v1950 = vadd.f32 %v1719, %v1916
        %v1951 = vadd.f32 %v1720, %v1921
        %v1952 = vadd.f32 %v1721, %v1926
        %v1953 = vadd.f32 %v1722, %v1931
        %v1954 = vadd.f32 %v1723, %v1936
        %v1955 = vld [vmem:[%s1726 + $0x2] sm:$0xff]
        %v1956 = vld [vmem:[%s1726 + $0xa] sm:$0xff]
        %v1957 = vld [vmem:[%s1726 + $0x1a] sm:$0xff]
        %v1958 = vld [vmem:[%s1726 + $0x22] sm:$0xff]
        %v1959 = vld [vmem:[%s1726 + $0x32] sm:$0xff]
        %v1960 = vld [vmem:[%s1726 + $0x3a] sm:$0xff]
        %v1961 = vld [vmem:[%s1726 + $0x4a] sm:$0xff]
        %v1962 = vld [vmem:[%s1726 + $0x52] sm:$0xff]
        %v1963 = vld [vmem:[%s1726 + $0x62] sm:$0xff]
        %v1964 = vld [vmem:[%s1726 + $0x6a] sm:$0xff]
        %v1965 = vld [vmem:[%s1726 + $0x7a] sm:$0xff]
        %v1966 = vld [vmem:[%s1726 + $0x82] sm:$0xff]
        %v1967 = vld [vmem:[%s1726 + $0x92] sm:$0xff]
        %v1968 = vld [vmem:[%s1726 + $0x9a] sm:$0xff]
        %v1969 = vld [vmem:[%s1726 + $0xaa] sm:$0xff]
        %v1970 = vld [vmem:[%s1726 + $0xb2] sm:$0xff]
        %v1972 = vsel %vm415, %v1955, 0
        %v1975 = vsel %vm415, %v1956, 0
        %v1978 = vsel %vm415, %v1957, 0
        %v1981 = vsel %vm415, %v1958, 0
        %v1984 = vsel %vm415, %v1959, 0
        %v1987 = vsel %vm415, %v1960, 0
        %v1990 = vsel %vm415, %v1961, 0
        %v1993 = vsel %vm415, %v1962, 0
        %v1996 = vsel %vm415, %v1963, 0
        %v1999 = vsel %vm415, %v1964, 0
        %v2002 = vsel %vm415, %v1965, 0
        %v2005 = vsel %vm415, %v1966, 0
        %v2008 = vsel %vm415, %v1967, 0
        %v2011 = vsel %vm415, %v1968, 0
        %v2014 = vsel %vm415, %v1969, 0
        %v2017 = vsel %vm415, %v1970, 0
        %v2020 = vsel %vm464, %v379, 0
        %2022 = vmatprep.subr.mxu0 0.0
        %2023 = vmatpush1.msra.mxu0 %v2020
        %2024 = vmatprep.subr.mxu0 0.0
        %2025 = vmatpush1.msra.mxu0 0.0
        %2026 = vmatprep.subr.mxu0 0.0
        %2027 = vmatpush1.msra.mxu0 0.0
        %2028 = vmatprep.subr.mxu0 0.0
        %2029 = vmatpush1.msra.mxu0 0.0
        %2030 = vmatprep.subr.mxu0 0.0
        %2031 = vmatpush1.msra.mxu0 0.0
        %2032 = vmatprep.subr.mxu0 0.0
        %2033 = vmatpush1.msra.mxu0 0.0
        %2034 = vmatprep.subr.mxu0 0.0
        %2035 = vmatpush1.msra.mxu0 0.0
        %2036 = vmatprep.subr.mxu0 0.0
        %2037 = vmatpush1.msra.mxu0 0.0
        %2038 = vmatprep.subr.mxu0 0.0
        %2039 = vmatpush1.msra.mxu0 0.0
        %2040 = vmatprep.subr.mxu0 0.0
        %2041 = vmatpush1.msra.mxu0 0.0
        %2042 = vmatprep.subr.mxu0 0.0
        %2043 = vmatpush1.msra.mxu0 0.0
        %2044 = vmatprep.subr.mxu0 0.0
        %2045 = vmatpush1.msra.mxu0 0.0
        %2046 = vmatprep.subr.mxu0 0.0
        %2047 = vmatpush1.msra.mxu0 0.0
        %2048 = vmatprep.subr.mxu0 0.0
        %2049 = vmatpush1.msra.mxu0 0.0
        %2050 = vmatprep.subr.mxu0 0.0
        %2051 = vmatpush1.msra.mxu0 0.0
        %2052 = vmatprep.subr.mxu0 0.0
        %2053 = vmatpush1.msra.mxu0 0.0
        %2054 = vmatprep.subr.mxu0 0.0
        %2055 = vmatpush1.msra.mxu0 0.0
        %2056 = vmatprep.subr.mxu0 0.0
        %2057 = vmatpush1.msra.mxu0 0.0
        %2058 = vmatprep.subr.mxu0 0.0
        %2059 = vmatpush1.msra.mxu0 0.0
        %2060 = vmatprep.subr.mxu0 0.0
        %2061 = vmatpush1.msra.mxu0 0.0
        %2062 = vmatprep.subr.mxu0 0.0
        %2063 = vmatpush1.msra.mxu0 0.0
        %2064 = vmatprep.subr.mxu0 0.0
        %2065 = vmatpush1.msra.mxu0 0.0
        %2066 = vmatprep.subr.mxu0 0.0
        %2067 = vmatpush1.msra.mxu0 0.0
        %2068 = vmatprep.subr.mxu0 0.0
        %2069 = vmatpush1.msra.mxu0 0.0
        %2070 = vmatprep.subr.mxu0 0.0
        %2071 = vmatpush1.msra.mxu0 0.0
        %2072 = vmatprep.subr.mxu0 0.0
        %2073 = vmatpush1.msra.mxu0 0.0
        %2074 = vmatprep.subr.mxu0 0.0
        %2075 = vmatpush1.msra.mxu0 0.0
        %2076 = vmatprep.subr.mxu0 0.0
        %2077 = vmatpush1.msra.mxu0 0.0
        %2078 = vmatprep.subr.mxu0 0.0
        %2079 = vmatpush1.msra.mxu0 0.0
        %2080 = vmatprep.subr.mxu0 0.0
        %2081 = vmatpush1.msra.mxu0 0.0
        %2082 = vmatprep.subr.mxu0 0.0
        %2083 = vmatpush1.msra.mxu0 0.0
        %2084 = vmatprep.subr.mxu0 0.0
        %2085 = vmatpush1.msra.mxu0 0.0
        %2086 = vmatprep.mubr.f32.mxu0 0.0
        %2087 = vmatmul.mubr.f32.gmra.mrb[0].mxu0 %v1972
        %v2088 = vpop.f32.mrb[0].mxu0
        %v2089 = vadd.f32 0.0, %v2088
        %v2090 = vpop.f32.mrb[0].mxu0
        %2091 = vmatprep.mubr.f32.mxu0 0.0
        %2092 = vmatmul.mubr.f32.gmra.mrb[0].mxu0 %v1975
        %v2093 = vpop.f32.mrb[0].mxu0
        %v2094 = vadd.f32 0.0, %v2093
        %v2095 = vpop.f32.mrb[0].mxu0
        %2096 = vmatprep.mubr.f32.mxu0 0.0
        %2097 = vmatmul.mubr.f32.gmra.mrb[0].mxu0 %v1978
        %v2098 = vpop.f32.mrb[0].mxu0
        %v2099 = vadd.f32 0.0, %v2098
        %v2100 = vpop.f32.mrb[0].mxu0
        %2101 = vmatprep.mubr.f32.mxu0 0.0
        %2102 = vmatmul.mubr.f32.gmra.mrb[0].mxu0 %v1981
        %v2103 = vpop.f32.mrb[0].mxu0
        %v2104 = vadd.f32 0.0, %v2103
        %v2105 = vpop.f32.mrb[0].mxu0
        %2106 = vmatprep.mubr.f32.mxu0 0.0
        %2107 = vmatmul.mubr.f32.gmra.mrb[0].mxu0 %v1984
        %v2108 = vpop.f32.mrb[0].mxu0
        %v2109 = vadd.f32 0.0, %v2108
        %v2110 = vpop.f32.mrb[0].mxu0
        %2111 = vmatprep.mubr.f32.mxu0 0.0
        %2112 = vmatmul.mubr.f32.gmra.mrb[0].mxu0 %v1987
        %v2113 = vpop.f32.mrb[0].mxu0
        %v2114 = vadd.f32 0.0, %v2113
        %v2115 = vpop.f32.mrb[0].mxu0
        %2116 = vmatprep.mubr.f32.mxu0 0.0
        %2117 = vmatmul.mubr.f32.gmra.mrb[0].mxu0 %v1990
        %v2118 = vpop.f32.mrb[0].mxu0
        %v2119 = vadd.f32 0.0, %v2118
        %v2120 = vpop.f32.mrb[0].mxu0
        %2121 = vmatprep.mubr.f32.mxu0 0.0
        %2122 = vmatmul.mubr.f32.gmra.mrb[0].mxu0 %v1993
        %v2123 = vpop.f32.mrb[0].mxu0
        %v2124 = vadd.f32 0.0, %v2123
        %v2125 = vpop.f32.mrb[0].mxu0
        %2126 = vmatprep.mubr.f32.mxu0 0.0
        %2127 = vmatmul.mubr.f32.gmra.mrb[0].mxu0 %v1996
        %v2128 = vpop.f32.mrb[0].mxu0
        %v2129 = vadd.f32 0.0, %v2128
        %v2130 = vpop.f32.mrb[0].mxu0
        %2131 = vmatprep.mubr.f32.mxu0 0.0
        %2132 = vmatmul.mubr.f32.gmra.mrb[0].mxu0 %v1999
        %v2133 = vpop.f32.mrb[0].mxu0
        %v2134 = vadd.f32 0.0, %v2133
        %v2135 = vpop.f32.mrb[0].mxu0
        %2136 = vmatprep.mubr.f32.mxu0 0.0
        %2137 = vmatmul.mubr.f32.gmra.mrb[0].mxu0 %v2002
        %v2138 = vpop.f32.mrb[0].mxu0
        %v2139 = vadd.f32 0.0, %v2138
        %v2140 = vpop.f32.mrb[0].mxu0
        %2141 = vmatprep.mubr.f32.mxu0 0.0
        %2142 = vmatmul.mubr.f32.gmra.mrb[0].mxu0 %v2005
        %v2143 = vpop.f32.mrb[0].mxu0
        %v2144 = vadd.f32 0.0, %v2143
        %v2145 = vpop.f32.mrb[0].mxu0
        %2146 = vmatprep.mubr.f32.mxu0 0.0
        %2147 = vmatmul.mubr.f32.gmra.mrb[0].mxu0 %v2008
        %v2148 = vpop.f32.mrb[0].mxu0
        %v2149 = vadd.f32 0.0, %v2148
        %v2150 = vpop.f32.mrb[0].mxu0
        %2151 = vmatprep.mubr.f32.mxu0 0.0
        %2152 = vmatmul.mubr.f32.gmra.mrb[0].mxu0 %v2011
        %v2153 = vpop.f32.mrb[0].mxu0
        %v2154 = vadd.f32 0.0, %v2153
        %v2155 = vpop.f32.mrb[0].mxu0
        %2156 = vmatprep.mubr.f32.mxu0 0.0
        %2157 = vmatmul.mubr.f32.gmra.mrb[0].mxu0 %v2014
        %v2158 = vpop.f32.mrb[0].mxu0
        %v2159 = vadd.f32 0.0, %v2158
        %v2160 = vpop.f32.mrb[0].mxu0
        %2161 = vmatprep.mubr.f32.mxu0 0.0
        %2162 = vmatmul.mubr.f32.gmra.mrb[0].mxu0 %v2017
        %v2163 = vpop.f32.mrb[0].mxu0
        %v2164 = vadd.f32 0.0, %v2163
        %v2165 = vpop.f32.mrb[0].mxu0
        %2166 = vdwg.mxu0
        %v2167 = vadd.f32 %v1939, %v2089
        %v2168 = vadd.f32 %v1940, %v2094
        %v2169 = vadd.f32 %v1941, %v2099
        %v2170 = vadd.f32 %v1942, %v2104
        %v2171 = vadd.f32 %v1943, %v2109
        %v2172 = vadd.f32 %v1944, %v2114
        %v2173 = vadd.f32 %v1945, %v2119
        %v2174 = vadd.f32 %v1946, %v2124
        %v2175 = vadd.f32 %v1947, %v2129
        %v2176 = vadd.f32 %v1948, %v2134
        %v2177 = vadd.f32 %v1949, %v2139
        %v2178 = vadd.f32 %v1950, %v2144
        %v2179 = vadd.f32 %v1951, %v2149
        %v2180 = vadd.f32 %v1952, %v2154
        %v2181 = vadd.f32 %v1953, %v2159
        %v2182 = vadd.f32 %v1954, %v2164
        %v2183 = vld [vmem:[%s1726 + $0x4] sm:$0xff]
        %v2184 = vld [vmem:[%s1726 + $0xc] sm:$0xff]
        %v2185 = vld [vmem:[%s1726 + $0x1c] sm:$0xff]
        %v2186 = vld [vmem:[%s1726 + $0x24] sm:$0xff]
        %v2187 = vld [vmem:[%s1726 + $0x34] sm:$0xff]
        %v2188 = vld [vmem:[%s1726 + $0x3c] sm:$0xff]
        %v2189 = vld [vmem:[%s1726 + $0x4c] sm:$0xff]
        %v2190 = vld [vmem:[%s1726 + $0x54] sm:$0xff]
        %v2191 = vld [vmem:[%s1726 + $0x64] sm:$0xff]
        %v2192 = vld [vmem:[%s1726 + $0x6c] sm:$0xff]
        %v2193 = vld [vmem:[%s1726 + $0x7c] sm:$0xff]
        %v2194 = vld [vmem:[%s1726 + $0x84] sm:$0xff]
        %v2195 = vld [vmem:[%s1726 + $0x94] sm:$0xff]
        %v2196 = vld [vmem:[%s1726 + $0x9c] sm:$0xff]
        %v2197 = vld [vmem:[%s1726 + $0xac] sm:$0xff]
        %v2198 = vld [vmem:[%s1726 + $0xb4] sm:$0xff]
        %v2200 = vsel %vm415, %v2183, 0
        %v2203 = vsel %vm415, %v2184, 0
        %v2206 = vsel %vm415, %v2185, 0
        %v2209 = vsel %vm415, %v2186, 0
        %v2212 = vsel %vm415, %v2187, 0
        %v2215 = vsel %vm415, %v2188, 0
        %v2218 = vsel %vm415, %v2189, 0
        %v2221 = vsel %vm415, %v2190, 0
        %v2224 = vsel %vm415, %v2191, 0
        %v2227 = vsel %vm415, %v2192, 0
        %v2230 = vsel %vm415, %v2193, 0
        %v2233 = vsel %vm415, %v2194, 0
        %v2236 = vsel %vm415, %v2195, 0
        %v2239 = vsel %vm415, %v2196, 0
        %v2242 = vsel %vm415, %v2197, 0
        %v2245 = vsel %vm415, %v2198, 0
        %v2248 = vsel %vm464, %v380, 0
        %2250 = vmatprep.subr.mxu0 0.0
        %2251 = vmatpush1.msra.mxu0 %v2248
        %2252 = vmatprep.subr.mxu0 0.0
        %2253 = vmatpush1.msra.mxu0 0.0
        %2254 = vmatprep.subr.mxu0 0.0
        %2255 = vmatpush1.msra.mxu0 0.0
        %2256 = vmatprep.subr.mxu0 0.0
        %2257 = vmatpush1.msra.mxu0 0.0
        %2258 = vmatprep.subr.mxu0 0.0
        %2259 = vmatpush1.msra.mxu0 0.0
        %2260 = vmatprep.subr.mxu0 0.0
        %2261 = vmatpush1.msra.mxu0 0.0
        %2262 = vmatprep.subr.mxu0 0.0
        %2263 = vmatpush1.msra.mxu0 0.0
        %2264 = vmatprep.subr.mxu0 0.0
        %2265 = vmatpush1.msra.mxu0 0.0
        %2266 = vmatprep.subr.mxu0 0.0
        %2267 = vmatpush1.msra.mxu0 0.0
        %2268 = vmatprep.subr.mxu0 0.0
        %2269 = vmatpush1.msra.mxu0 0.0
        %2270 = vmatprep.subr.mxu0 0.0
        %2271 = vmatpush1.msra.mxu0 0.0
        %2272 = vmatprep.subr.mxu0 0.0
        %2273 = vmatpush1.msra.mxu0 0.0
        %2274 = vmatprep.subr.mxu0 0.0
        %2275 = vmatpush1.msra.mxu0 0.0
        %2276 = vmatprep.subr.mxu0 0.0
        %2277 = vmatpush1.msra.mxu0 0.0
        %2278 = vmatprep.subr.mxu0 0.0
        %2279 = vmatpush1.msra.mxu0 0.0
        %2280 = vmatprep.subr.mxu0 0.0
        %2281 = vmatpush1.msra.mxu0 0.0
        %2282 = vmatprep.subr.mxu0 0.0
        %2283 = vmatpush1.msra.mxu0 0.0
        %2284 = vmatprep.subr.mxu0 0.0
        %2285 = vmatpush1.msra.mxu0 0.0
        %2286 = vmatprep.subr.mxu0 0.0
        %2287 = vmatpush1.msra.mxu0 0.0
        %2288 = vmatprep.subr.mxu0 0.0
        %2289 = vmatpush1.msra.mxu0 0.0
        %2290 = vmatprep.subr.mxu0 0.0
        %2291 = vmatpush1.msra.mxu0 0.0
        %2292 = vmatprep.subr.mxu0 0.0
        %2293 = vmatpush1.msra.mxu0 0.0
        %2294 = vmatprep.subr.mxu0 0.0
        %2295 = vmatpush1.msra.mxu0 0.0
        %2296 = vmatprep.subr.mxu0 0.0
        %2297 = vmatpush1.msra.mxu0 0.0
        %2298 = vmatprep.subr.mxu0 0.0
        %2299 = vmatpush1.msra.mxu0 0.0
        %2300 = vmatprep.subr.mxu0 0.0
        %2301 = vmatpush1.msra.mxu0 0.0
        %2302 = vmatprep.subr.mxu0 0.0
        %2303 = vmatpush1.msra.mxu0 0.0
        %2304 = vmatprep.subr.mxu0 0.0
        %2305 = vmatpush1.msra.mxu0 0.0
        %2306 = vmatprep.subr.mxu0 0.0
        %2307 = vmatpush1.msra.mxu0 0.0
        %2308 = vmatprep.subr.mxu0 0.0
        %2309 = vmatpush1.msra.mxu0 0.0
        %2310 = vmatprep.subr.mxu0 0.0
        %2311 = vmatpush1.msra.mxu0 0.0
        %2312 = vmatprep.subr.mxu0 0.0
        %2313 = vmatpush1.msra.mxu0 0.0
        %2314 = vmatprep.mubr.f32.mxu0 0.0
        %2315 = vmatmul.mubr.f32.gmra.mrb[0].mxu0 %v2200
        %v2316 = vpop.f32.mrb[0].mxu0
        %v2317 = vadd.f32 0.0, %v2316
        %v2318 = vpop.f32.mrb[0].mxu0
        %2319 = vmatprep.mubr.f32.mxu0 0.0
        %2320 = vmatmul.mubr.f32.gmra.mrb[0].mxu0 %v2203
        %v2321 = vpop.f32.mrb[0].mxu0
        %v2322 = vadd.f32 0.0, %v2321
        %v2323 = vpop.f32.mrb[0].mxu0
        %2324 = vmatprep.mubr.f32.mxu0 0.0
        %2325 = vmatmul.mubr.f32.gmra.mrb[0].mxu0 %v2206
        %v2326 = vpop.f32.mrb[0].mxu0
        %v2327 = vadd.f32 0.0, %v2326
        %v2328 = vpop.f32.mrb[0].mxu0
        %2329 = vmatprep.mubr.f32.mxu0 0.0
        %2330 = vmatmul.mubr.f32.gmra.mrb[0].mxu0 %v2209
        %v2331 = vpop.f32.mrb[0].mxu0
        %v2332 = vadd.f32 0.0, %v2331
        %v2333 = vpop.f32.mrb[0].mxu0
        %2334 = vmatprep.mubr.f32.mxu0 0.0
        %2335 = vmatmul.mubr.f32.gmra.mrb[0].mxu0 %v2212
        %v2336 = vpop.f32.mrb[0].mxu0
        %v2337 = vadd.f32 0.0, %v2336
        %v2338 = vpop.f32.mrb[0].mxu0
        %2339 = vmatprep.mubr.f32.mxu0 0.0
        %2340 = vmatmul.mubr.f32.gmra.mrb[0].mxu0 %v2215
        %v2341 = vpop.f32.mrb[0].mxu0
        %v2342 = vadd.f32 0.0, %v2341
        %v2343 = vpop.f32.mrb[0].mxu0
        %2344 = vmatprep.mubr.f32.mxu0 0.0
        %2345 = vmatmul.mubr.f32.gmra.mrb[0].mxu0 %v2218
        %v2346 = vpop.f32.mrb[0].mxu0
        %v2347 = vadd.f32 0.0, %v2346
        %v2348 = vpop.f32.mrb[0].mxu0
        %2349 = vmatprep.mubr.f32.mxu0 0.0
        %2350 = vmatmul.mubr.f32.gmra.mrb[0].mxu0 %v2221
        %v2351 = vpop.f32.mrb[0].mxu0
        %v2352 = vadd.f32 0.0, %v2351
        %v2353 = vpop.f32.mrb[0].mxu0
        %2354 = vmatprep.mubr.f32.mxu0 0.0
        %2355 = vmatmul.mubr.f32.gmra.mrb[0].mxu0 %v2224
        %v2356 = vpop.f32.mrb[0].mxu0
        %v2357 = vadd.f32 0.0, %v2356
        %v2358 = vpop.f32.mrb[0].mxu0
        %2359 = vmatprep.mubr.f32.mxu0 0.0
        %2360 = vmatmul.mubr.f32.gmra.mrb[0].mxu0 %v2227
        %v2361 = vpop.f32.mrb[0].mxu0
        %v2362 = vadd.f32 0.0, %v2361
        %v2363 = vpop.f32.mrb[0].mxu0
        %2364 = vmatprep.mubr.f32.mxu0 0.0
        %2365 = vmatmul.mubr.f32.gmra.mrb[0].mxu0 %v2230
        %v2366 = vpop.f32.mrb[0].mxu0
        %v2367 = vadd.f32 0.0, %v2366
        %v2368 = vpop.f32.mrb[0].mxu0
        %2369 = vmatprep.mubr.f32.mxu0 0.0
        %2370 = vmatmul.mubr.f32.gmra.mrb[0].mxu0 %v2233
        %v2371 = vpop.f32.mrb[0].mxu0
        %v2372 = vadd.f32 0.0, %v2371
        %v2373 = vpop.f32.mrb[0].mxu0
        %2374 = vmatprep.mubr.f32.mxu0 0.0
        %2375 = vmatmul.mubr.f32.gmra.mrb[0].mxu0 %v2236
        %v2376 = vpop.f32.mrb[0].mxu0
        %v2377 = vadd.f32 0.0, %v2376
        %v2378 = vpop.f32.mrb[0].mxu0
        %2379 = vmatprep.mubr.f32.mxu0 0.0
        %2380 = vmatmul.mubr.f32.gmra.mrb[0].mxu0 %v2239
        %v2381 = vpop.f32.mrb[0].mxu0
        %v2382 = vadd.f32 0.0, %v2381
        %v2383 = vpop.f32.mrb[0].mxu0
        %2384 = vmatprep.mubr.f32.mxu0 0.0
        %2385 = vmatmul.mubr.f32.gmra.mrb[0].mxu0 %v2242
        %v2386 = vpop.f32.mrb[0].mxu0
        %v2387 = vadd.f32 0.0, %v2386
        %v2388 = vpop.f32.mrb[0].mxu0
        %2389 = vmatprep.mubr.f32.mxu0 0.0
        %2390 = vmatmul.mubr.f32.gmra.mrb[0].mxu0 %v2245
        %v2391 = vpop.f32.mrb[0].mxu0
        %v2392 = vadd.f32 0.0, %v2391
        %v2393 = vpop.f32.mrb[0].mxu0
        %2394 = vdwg.mxu0
        %v2395 = vadd.f32 %v2167, %v2317
        %v2396 = vadd.f32 %v2168, %v2322
        %v2397 = vadd.f32 %v2169, %v2327
        %v2398 = vadd.f32 %v2170, %v2332
        %v2399 = vadd.f32 %v2171, %v2337
        %v2400 = vadd.f32 %v2172, %v2342
        %v2401 = vadd.f32 %v2173, %v2347
        %v2402 = vadd.f32 %v2174, %v2352
        %v2403 = vadd.f32 %v2175, %v2357
        %v2404 = vadd.f32 %v2176, %v2362
        %v2405 = vadd.f32 %v2177, %v2367
        %v2406 = vadd.f32 %v2178, %v2372
        %v2407 = vadd.f32 %v2179, %v2377
        %v2408 = vadd.f32 %v2180, %v2382
        %v2409 = vadd.f32 %v2181, %v2387
        %v2410 = vadd.f32 %v2182, %v2392
        %vm2411 = vcmask 64512
        %2412 = vst.msk [vmem:[%s244] sm:$0xff] %vm2411, %v2395
        %2413 = vst.msk [vmem:[%s244 + $0x8] sm:$0xff] %vm2411, %v2396
        %2414 = vst.msk [vmem:[%s244 + $0x10] sm:$0xff] %vm2411, %v2397
        %2415 = vst.msk [vmem:[%s244 + $0x18] sm:$0xff] %vm2411, %v2398
        %2416 = vst.msk [vmem:[%s244 + $0x20] sm:$0xff] %vm2411, %v2399
        %2417 = vst.msk [vmem:[%s244 + $0x28] sm:$0xff] %vm2411, %v2400
        %2418 = vst.msk [vmem:[%s244 + $0x30] sm:$0xff] %vm2411, %v2401
        %2419 = vst.msk [vmem:[%s244 + $0x38] sm:$0xff] %vm2411, %v2402
        %2420 = vst.msk [vmem:[%s244 + $0x40] sm:$0xff] %vm2411, %v2403
        %2421 = vst.msk [vmem:[%s244 + $0x48] sm:$0xff] %vm2411, %v2404
        %2422 = vst.msk [vmem:[%s244 + $0x50] sm:$0xff] %vm2411, %v2405
        %2423 = vst.msk [vmem:[%s244 + $0x58] sm:$0xff] %vm2411, %v2406
        %2424 = vst.msk [vmem:[%s244 + $0x60] sm:$0xff] %vm2411, %v2407
        %2425 = vst.msk [vmem:[%s244 + $0x68] sm:$0xff] %vm2411, %v2408
        %2426 = vst.msk [vmem:[%s244 + $0x70] sm:$0xff] %vm2411, %v2409
        %2427 = vst.msk [vmem:[%s244 + $0x78] sm:$0xff] %vm2411, %v2410
        %v2428 = vsel %vm2411, %v2395, 0.0
        %v2429 = vsel %vm2411, %v2396, 0.0
        %v2430 = vadd.f32 %v2428, %v2429
        %v2431 = vsel %vm2411, %v2397, 0.0
        %v2432 = vadd.f32 %v2430, %v2431
        %v2433 = vsel %vm2411, %v2398, 0.0
        %v2434 = vadd.f32 %v2432, %v2433
        %v2435 = vsel %vm2411, %v2399, 0.0
        %v2436 = vadd.f32 %v2434, %v2435
        %v2437 = vsel %vm2411, %v2400, 0.0
        %v2438 = vadd.f32 %v2436, %v2437
        %v2439 = vsel %vm2411, %v2401, 0.0
        %v2440 = vadd.f32 %v2438, %v2439
        %v2441 = vsel %vm2411, %v2402, 0.0
        %v2442 = vadd.f32 %v2440, %v2441
        %v2443 = vsel %vm2411, %v2403, 0.0
        %v2444 = vadd.f32 %v2442, %v2443
        %v2445 = vsel %vm2411, %v2404, 0.0
        %v2446 = vadd.f32 %v2444, %v2445
        %v2447 = vsel %vm2411, %v2405, 0.0
        %v2448 = vadd.f32 %v2446, %v2447
        %v2449 = vsel %vm2411, %v2406, 0.0
        %v2450 = vadd.f32 %v2448, %v2449
        %v2451 = vsel %vm2411, %v2407, 0.0
        %v2452 = vadd.f32 %v2450, %v2451
        %v2453 = vsel %vm2411, %v2408, 0.0
        %v2454 = vadd.f32 %v2452, %v2453
        %v2455 = vsel %vm2411, %v2409, 0.0
        %v2456 = vadd.f32 %v2454, %v2455
        %v2457 = vsel %vm2411, %v2410, 0.0
        %v2458 = vadd.f32 %v2456, %v2457
        %v2459 = vrot.slane %v2458, 4
        %v2460 = vadd.f32 %v2458, %v2459
        %v2461 = vrot.slane %v2460, 2
        %v2462 = vadd.f32 %v2460, %v2461
        %v2463 = vrot.slane %v2462, 1
        %v2464 = vadd.f32 %v2462, %v2463
        %vm2465 = vcmask 57344
        %2466 = vst.msk [vmem:[%s223] sm:$0x1] %vm2465, %v2464
        %v2467 = vmul.f32 %v2395, %v2395
        %v2468 = vmul.f32 %v2396, %v2396
        %v2469 = vmul.f32 %v2397, %v2397
        %v2470 = vmul.f32 %v2398, %v2398
        %v2471 = vmul.f32 %v2399, %v2399
        %v2472 = vmul.f32 %v2400, %v2400
        %v2473 = vmul.f32 %v2401, %v2401
        %v2474 = vmul.f32 %v2402, %v2402
        %v2475 = vmul.f32 %v2403, %v2403
        %v2476 = vmul.f32 %v2404, %v2404
        %v2477 = vmul.f32 %v2405, %v2405
        %v2478 = vmul.f32 %v2406, %v2406
        %v2479 = vmul.f32 %v2407, %v2407
        %v2480 = vmul.f32 %v2408, %v2408
        %v2481 = vmul.f32 %v2409, %v2409
        %v2482 = vmul.f32 %v2410, %v2410
        %v2483 = vsel %vm2411, %v2467, 0.0
        %v2484 = vsel %vm2411, %v2468, 0.0
        %v2485 = vadd.f32 %v2483, %v2484
        %v2486 = vsel %vm2411, %v2469, 0.0
        %v2487 = vadd.f32 %v2485, %v2486
        %v2488 = vsel %vm2411, %v2470, 0.0
        %v2489 = vadd.f32 %v2487, %v2488
        %v2490 = vsel %vm2411, %v2471, 0.0
        %v2491 = vadd.f32 %v2489, %v2490
        %v2492 = vsel %vm2411, %v2472, 0.0
        %v2493 = vadd.f32 %v2491, %v2492
        %v2494 = vsel %vm2411, %v2473, 0.0
        %v2495 = vadd.f32 %v2493, %v2494
        %v2496 = vsel %vm2411, %v2474, 0.0
        %v2497 = vadd.f32 %v2495, %v2496
        %v2498 = vsel %vm2411, %v2475, 0.0
        %v2499 = vadd.f32 %v2497, %v2498
        %v2500 = vsel %vm2411, %v2476, 0.0
        %v2501 = vadd.f32 %v2499, %v2500
        %v2502 = vsel %vm2411, %v2477, 0.0
        %v2503 = vadd.f32 %v2501, %v2502
        %v2504 = vsel %vm2411, %v2478, 0.0
        %v2505 = vadd.f32 %v2503, %v2504
        %v2506 = vsel %vm2411, %v2479, 0.0
        %v2507 = vadd.f32 %v2505, %v2506
        %v2508 = vsel %vm2411, %v2480, 0.0
        %v2509 = vadd.f32 %v2507, %v2508
        %v2510 = vsel %vm2411, %v2481, 0.0
        %v2511 = vadd.f32 %v2509, %v2510
        %v2512 = vsel %vm2411, %v2482, 0.0
        %v2513 = vadd.f32 %v2511, %v2512
        %v2514 = vrot.slane %v2513, 4
        %v2515 = vadd.f32 %v2513, %v2514
        %v2516 = vrot.slane %v2515, 2
        %v2517 = vadd.f32 %v2515, %v2516
        %v2518 = vrot.slane %v2517, 1
        %v2519 = vadd.f32 %v2517, %v2518
        %2520 = vst.msk [vmem:[%s229] sm:$0x1] %vm2465, %v2519
        %s2521 = smul.u32 8, %s27
        %p2522 = scmp.lt.s32.totalorder %s26, 1
        %s2523 = scalar_select %p2522, %s26, 1
        %p2524 = scmp.lt.s32.totalorder %s2521, 15
        %s2525 = scalar_select %p2524, %s2521, 15
        %s2526 = smul.addr %s2525, 2
        %s2527 = smul.addr %s2523, 32
        %s2528 = sadd.s32 %s2526, %s2527
        %s2529 = smul.addr %s2528, 8
        %s2530 = scalar_lea.vmem %s2, %s2529
        %s2531 = sand.u32 %s119, 1
        %s2532 = scalar_lea.sflag [#allocation4], %s2531
        %s2533 = sand.u32 %s119, 1
        %s2534 = scalar_lea.vmem [#allocation3], %s2533
        %s2535 = sand.u32 %s147, 1
        %s2536 = scalar_lea.sflag [#allocation6], %s2535
        %s2537 = sand.u32 %s147, 1
        %s2538 = scalar_lea.vmem [#allocation5], %s2537
        // Predicated region
        $region33: #{tpu_custom_call.1} parent=27 // pred_check
          %p2539 = pneg %p101
        $region34: #{tpu_custom_call.1} parent=27 // pred_check_branch
          %2541 = sbr.rel (%p2539) target = $region36
        $region35: #{tpu_custom_call.1} parent=27 // pred_region
          %s2542 = smul.u32 8, %s27
        $region36: #{tpu_custom_call.1} parent=27 // pred_fallthru
          _
        // Predicated region
        $region37: #{tpu_custom_call.1} parent=27 // pred_check
          %p2543 = pneg %p129
        $region38: #{tpu_custom_call.1} parent=27 // pred_check_branch
          %2545 = sbr.rel (%p2543) target = $region40
        $region39: #{tpu_custom_call.1} parent=27 // pred_region
          %s2547 = ssub.s32 16, 16
          %2548 = vsyncadd %s2532, %s2547
          %s2549 = smul.addr %s26, 2
          %s2550 = sadd.s32 %s27, %s2549
          %s2551 = smul.addr %s2550, 16
          %s2552 = scalar_lea.hbm %s3, %s2551
          %s2554 = sshll.u32 %s2534, 4
          %s2555 = int_to_ptr.vmem [resolvable:$true] %s2554
          %2557 = dma.vmem_to_hbm [thread:$0]  %s2555, 16, %s2552, %s2532
        $region40: #{tpu_custom_call.1} parent=27 // pred_fallthru
          _
        // Predicated region
        $region41: #{tpu_custom_call.1} parent=27 // pred_check
          %p2558 = pneg %p157
        $region42: #{tpu_custom_call.1} parent=27 // pred_check_branch
          %2560 = sbr.rel (%p2558) target = $region44
        $region43: #{tpu_custom_call.1} parent=27 // pred_region
          %s2562 = ssub.s32 16, 16
          %2563 = vsyncadd %s2536, %s2562
          %s2564 = smul.addr %s26, 2
          %s2565 = sadd.s32 %s27, %s2564
          %s2566 = smul.addr %s2565, 16
          %s2567 = scalar_lea.hbm %s4, %s2566
          %s2569 = sshll.u32 %s2538, 4
          %s2570 = int_to_ptr.vmem [resolvable:$true] %s2569
          %2572 = dma.vmem_to_hbm [thread:$0]  %s2570, 16, %s2567, %s2536
        $region44: #{tpu_custom_call.1} parent=27 // pred_fallthru
          _
      $region28: #{tpu_custom_call.1} parent=5 // pred_fallthru
        _
      %p2573 = scmp.le.s32.totalorder 2, %s17
      // Predicated region
      $region45: #{tpu_custom_call.1} parent=5 // pred_check
        %p2574 = pneg %p2573
      $region46: #{tpu_custom_call.1} parent=5 // pred_check_branch
        %2576 = sbr.rel (%p2574) target = $region48
      $region47: #{tpu_custom_call.1} parent=5 // pred_region
        %s2577 = ssub.s32 %s17, 2
        // Predicated region
        $region49: #{tpu_custom_call.1} parent=47 // pred_check
          %p2578 = pneg %p107
        $region50: #{tpu_custom_call.1} parent=47 // pred_check_branch
          %2580 = sbr.rel (%p2578) target = $region52
        $region51: #{tpu_custom_call.1} parent=47 // pred_region
          %s2581 = smul.u32 8, %s29
          %p2582 = scmp.lt.s32.totalorder %s28, 1
          %s2583 = scalar_select %p2582, %s28, 1
          %p2584 = scmp.lt.s32.totalorder %s2581, 15
          %s2585 = scalar_select %p2584, %s2581, 15
          %s2586 = smul.addr %s2585, 2
          %s2587 = smul.addr %s2583, 32
          %s2588 = sadd.s32 %s2586, %s2587
          %s2589 = smul.addr %s2588, 8
          %s2590 = scalar_lea.vmem %s2, %s2589
        $region52: #{tpu_custom_call.1} parent=47 // pred_fallthru
          _
        // Predicated region
        $region53: #{tpu_custom_call.1} parent=47 // pred_check
          %p2591 = pneg %p135
        $region54: #{tpu_custom_call.1} parent=47 // pred_check_branch
          %2593 = sbr.rel (%p2591) target = $region56
        $region55: #{tpu_custom_call.1} parent=47 // pred_region
          %s2594 = sand.u32 %s120, 1
          %s2595 = scalar_lea.sflag [#allocation4], %s2594
          %s2596 = sand.u32 %s120, 1
          %s2597 = scalar_lea.vmem [#allocation3], %s2596
          %2598 = dma.done %s2595, 16
        $region56: #{tpu_custom_call.1} parent=47 // pred_fallthru
          _
        // Predicated region
        $region57: #{tpu_custom_call.1} parent=47 // pred_check
          %p2599 = pneg %p163
        $region58: #{tpu_custom_call.1} parent=47 // pred_check_branch
          %2601 = sbr.rel (%p2599) target = $region60
        $region59: #{tpu_custom_call.1} parent=47 // pred_region
          %s2602 = sand.u32 %s148, 1
          %s2603 = scalar_lea.sflag [#allocation6], %s2602
          %s2604 = sand.u32 %s148, 1
          %s2605 = scalar_lea.vmem [#allocation5], %s2604
          %2606 = dma.done %s2603, 16
        $region60: #{tpu_custom_call.1} parent=47 // pred_fallthru
          _
      $region48: #{tpu_custom_call.1} parent=5 // pred_fallthru
        _
    $region6: #{tpu_custom_call.1} parent=1 // loop_footer
      %s21 = sadd.s32 1, %s17
    $region7: #{tpu_custom_call.1} parent=1 // loop_footer_branch
      %16 = sbr.rel target = $region3
    $region8: #{tpu_custom_call.1} parent=1 // loop_exit
      _
    %2607 = vsyncpa [#allocation4], 1
    %s2608 = scalar_lea.sflag [#allocation4], 1
    %2609 = vsyncpa %s2608, 1
    %2610 = vsyncpa [#allocation6], 1
    %s2611 = scalar_lea.sflag [#allocation6], 1
    %2612 = vsyncpa %s2611, 1

</llo_original>
